<compile_context>
chip_gen: v5e
topology: v5e:2x2
jax: 0.10.0
libtpu: 0.0.40
codegen_flags: <defaults>
</compile_context>

<pallas_src>
import jax
import jax.numpy as jnp
from jax.experimental import pallas as pl
from jax.experimental.pallas import tpu as pltpu


# ------------------------------ Pallas kernel --------------------------------

def bigcn_kernel(a_ref, x1_ref, re1_ref, p_ref, rsel_ref,
                 wc1_ref, bc1_ref, wc2a_ref, wc2b_ref, bc2_ref,
                 wfa_ref, wfb_ref,
                 out_ref,
                 z_sc, pa_sc, pb_sc):
    """Grid = (direction, phase, row_tile).

    direction ("parallel"):  0 = TD, 1 = BU (A_hat / x1 / weights stacked on axis 0).
    phase     ("arbitrary"): 0 = conv1 + relu(cat)@Wc2 -> z (bf16), root-row accumulate.
                             1 = conv2 + mean-pool accumulate (+ tiny fc on last tile).
    row_tile  ("arbitrary"): tile_m destination-node rows of A_hat per step.
    """
    f32 = jnp.float32
    ph = pl.program_id(1)
    t = pl.program_id(2)
    tm = re1_ref.shape[0]
    row0 = pl.multiple_of(t * tm, tm)

    @pl.when(jnp.logical_and(ph == 0, t == 0))
    def _init():
        pa_sc[...] = jnp.zeros_like(pa_sc)
        pb_sc[...] = jnp.zeros_like(pb_sc)

    @pl.when(ph == 0)
    def _conv1_phase():
        a_tile = a_ref[pl.ds(row0, tm), :]                                   # (tm, N) bf16
        # conv1, reassociated: (A @ x1) @ Wc1 -> N^2 work at width C, single-pass bf16.
        ax1 = jnp.dot(a_tile, x1_ref[...], preferred_element_type=f32)       # (tm, C)
        g1 = jnp.dot(ax1, wc1_ref[...], preferred_element_type=f32) + bc1_ref[...]
        # relu(cat(g1, root_extend(x1))) @ Wc2, concat-free via the split weight.
        z = (jnp.dot(jnp.maximum(g1, 0.0), wc2a_ref[...], preferred_element_type=f32)
             + jnp.dot(jnp.maximum(re1_ref[...], 0.0), wc2b_ref[...],
                       preferred_element_type=f32))
        z_sc[pl.ds(row0, tm), :] = z.astype(jnp.bfloat16)
        # root rows of g1 (== scatter_mean of root_extend(x2)), per-tile accumulate.
        pb_sc[...] += jnp.dot(rsel_ref[...], g1, preferred_element_type=f32)

    @pl.when(ph == 1)
    def _conv2_phase():
        a_tile = a_ref[pl.ds(row0, tm), :]                                   # (tm, N) bf16
        g2 = jnp.maximum(
            jnp.dot(a_tile, z_sc[...], preferred_element_type=f32) + bc2_ref[...], 0.0)
        # mean pooling accumulated per tile: no (N,O) g2 scratch, no serial tail.
        pa_sc[...] += jnp.dot(p_ref[...], g2, preferred_element_type=f32)

    @pl.when(jnp.logical_and(ph == 1, t == pl.num_programs(2) - 1))
    def _finalize():
        # Apply this direction's half of the final fc; only (B, out_dim) leaves VMEM.
        out_ref[...] = (jnp.dot(pa_sc[...], wfa_ref[...], preferred_element_type=f32)
                        + jnp.dot(pb_sc[...], wfb_ref[...], preferred_element_type=f32))


# --------------------------------- wrapper ------------------------------------

def _fold_in_proj(q):
    """in_proj_1 -> in_proj_2 -> in_proj_3 is purely affine; fold to x*v + b."""
    v = q["w1"] @ q["w2"] @ q["w3"]                                   # (1, C)
    b = (q["b1"] @ q["w2"] + q["b2"]) @ q["w3"] + q["b3"]             # (1, C)
    return v, b


def _vmem_limit_bytes(n, c, h, o, b, out_dim, tile_m):
    """Explicit VMEM budget: resident A_hat/x1 (double-buffered across the
    direction axis), streamed per-tile inputs, scratch, weights + margin."""
    bf, f4 = 2, 4
    resident = 2 * (n * n + n * c) * bf                       # A_hat + x1 (x2 buffers)
    scratch = n * o * bf + b * (o + h) * f4                   # z_sc + pooled accumulators
    streamed = 2 * (tile_m * c * f4 + 2 * b * tile_m * f4)    # re1 + p + rsel tiles (x2)
    weights = 4 * (c * h + h * o + c * o + (o + h) * out_dim + h + 2 * o) * f4
    est = resident + scratch + streamed + weights
    return int(min(max(2 * est + (4 << 20), 16 << 20), 48 << 20))


def bigcn_forward(x, a_td, a_bu, batch, root_index, params, *, tile_m=None):
    n = x.shape[0]
    num_graphs = int(root_index.shape[0])
    td, bu, fc = params["td"], params["bu"], params["fc"]
    c, h = td["wc1"].shape
    o = td["wc2"].shape[1]
    out_dim = fc["w"].shape[1]

    # Row-tile size: whole N when small (demo), 256-row strips otherwise
    # (MXU-row friendly on v6e/v7x, fine on v5e); multiples of 16 for bf16.
    if tile_m is None:
        tile_m = n if n <= 256 else 256
    assert n % tile_m == 0 and tile_m % 16 == 0
    num_tiles = n // tile_m

    # ---- parameter plumbing + hoisted x1 / root_extend(x1) (tiny, once, XLA) ----
    v_td, b_td = _fold_in_proj(td)
    v_bu, b_bu = _fold_in_proj(bu)
    x1_td = x * v_td + b_td                                            # (N, C) f32
    x1_bu = x * v_bu + b_bu
    x1 = jnp.stack([x1_td, x1_bu]).astype(jnp.bfloat16)                # (2, N, C) bf16
    re1 = jnp.stack([x1_td[root_index][batch],
                     x1_bu[root_index][batch]])                        # (2, N, C) f32

    wc1 = jnp.stack([td["wc1"], bu["wc1"]])             # (2, C, H)
    bc1 = jnp.stack([td["bc1"], bu["bc1"]])             # (2, 1, H)
    wc2a = jnp.stack([td["wc2"][:h], bu["wc2"][:h]])    # (2, H, O)   rows for g1
    wc2b = jnp.stack([td["wc2"][h:], bu["wc2"][h:]])    # (2, C, O)   rows for root_extend
    bc2 = jnp.stack([td["bc2"], bu["bc2"]])             # (2, 1, O)
    w_td, w_bu = fc["w"][:o + h], fc["w"][o + h:]
    wfa = jnp.stack([w_td[:o], w_bu[:o]])               # (2, O, out_dim)
    wfb = jnp.stack([w_td[o:], w_bu[o:]])               # (2, H, out_dim)

    # ---- graph operators (glue) ----
    a_stack = jnp.stack([a_td, a_bu]).astype(jnp.bfloat16)             # (2, N, N)
    s_seg = jax.nn.one_hot(batch, num_graphs, dtype=jnp.float32)       # (N, B)
    p_mat = (s_seg / jnp.maximum(s_seg.sum(axis=0), 1.0)).T            # (B, N) mean pool
    rsel = jax.nn.one_hot(root_index, n, dtype=jnp.float32)            # (B, N) root select

    blk = pl.BlockSpec
    partials = pl.pallas_call(
        bigcn_kernel,
        out_shape=jax.ShapeDtypeStruct((2, num_graphs, out_dim), jnp.float32),
        grid=(2, 2, num_tiles),
        in_specs=[
            blk((None, n, n), lambda b, ph, t: (b, 0, 0)),            # A_hat, VMEM-resident
            blk((None, n, c), lambda b, ph, t: (b, 0, 0)),            # x1 (bf16)
            blk((None, tile_m, c), lambda b, ph, t: (b, t, 0)),       # root_extend(x1) tile
            blk((num_graphs, tile_m), lambda b, ph, t: (0, t)),       # mean-pool tile
            blk((num_graphs, tile_m), lambda b, ph, t: (0, t)),       # root-select tile
            blk((None, c, h), lambda b, ph, t: (b, 0, 0)),            # Wc1
            blk((None, 1, h), lambda b, ph, t: (b, 0, 0)),            # bc1
            blk((None, h, o), lambda b, ph, t: (b, 0, 0)),            # Wc2 (g1 rows)
            blk((None, c, o), lambda b, ph, t: (b, 0, 0)),            # Wc2 (root rows)
            blk((None, 1, o), lambda b, ph, t: (b, 0, 0)),            # bc2
            blk((None, o, out_dim), lambda b, ph, t: (b, 0, 0)),      # fc (g2 part)
            blk((None, h, out_dim), lambda b, ph, t: (b, 0, 0)),      # fc (root part)
        ],
        out_specs=blk((None, num_graphs, out_dim), lambda b, ph, t: (b, 0, 0)),
        scratch_shapes=[
            pltpu.VMEM((n, o), jnp.bfloat16),           # z (conv2 input, bf16 MXU rhs)
            pltpu.VMEM((num_graphs, o), jnp.float32),   # pooled mean of g2
            pltpu.VMEM((num_graphs, h), jnp.float32),   # root rows of g1
        ],
        compiler_params=pltpu.CompilerParams(
            dimension_semantics=("parallel", "arbitrary", "arbitrary"),
            vmem_limit_bytes=_vmem_limit_bytes(n, c, h, o, num_graphs, out_dim, tile_m)),
    )(a_stack, x1, re1, p_mat, rsel, wc1, bc1, wc2a, wc2b, bc2, wfa, wfb)

    # Tiny (2, B, out_dim) epilogue: sum the TD/BU halves and add the fc bias.
    return partials[0] + partials[1] + fc["b"]


# ----------------------- graph preprocessing (glue) ---------------------------

def build_norm_adj(edge_index, num_nodes):
    """Dense D^-1/2 (A + I) D^-1/2 with A[dst, src] = 1 (PyG GCNConv norm)."""
    src, dst = edge_index[0], edge_index[1]
    loop = jnp.arange(num_nodes)
    src = jnp.concatenate([src, loop])
    dst = jnp.concatenate([dst, loop])
    adj = jnp.zeros((num_nodes, num_nodes), jnp.float32).at[dst, src].add(1.0)
    deg = adj.sum(axis=1)
    dinv = jnp.where(deg > 0, 1.0 / jnp.sqrt(deg), 0.0)
    return dinv[:, None] * adj * dinv[None, :]


# ----------------------------- parameter setup --------------------------------

def init_block_params(key, c, h, o):
    ks = jax.random.split(key, 5)

    def w(k, shape):
        return jax.random.normal(k, shape, jnp.float32) / jnp.sqrt(float(shape[0]))

    return {
        "w1": w(ks[0], (1, c)),       "b1": jnp.full((1, c), 0.05, jnp.float32),
        "w2": w(ks[1], (c, 4 * c)),   "b2": jnp.full((1, 4 * c), 0.05, jnp.float32),
        "w3": w(ks[2], (4 * c, c)),   "b3": jnp.full((1, c), 0.05, jnp.float32),
        "wc1": w(ks[3], (c, h)),      "bc1": jnp.full((1, h), 0.05, jnp.float32),
        "wc2": w(ks[4], (h + c, o)),  "bc2": jnp.full((1, o), 0.05, jnp.float32),
    }


def init_fc_params(key, h, o, out_dim):
    w = jax.random.normal(key, (2 * (o + h), out_dim), jnp.float32) / jnp.sqrt(2.0 * (o + h))
    return {"w": w, "b": jnp.full((1, out_dim), 0.05, jnp.float32)}


# -------------------------------- reference -----------------------------------

def bigcn_ref(x, a_td, a_bu, batch, root_index, num_graphs, params):
    """Literal (un-folded, concat-based, gather-based) f32 reference forward."""
    s = jax.nn.one_hot(batch, num_graphs, dtype=jnp.float32)           # (N, B)
    p = (s / jnp.maximum(s.sum(axis=0), 1.0)).T                        # (B, N)

    def block(a, q):
        hfeat = x @ q["w1"] + q["b1"]
        hfeat = hfeat @ q["w2"] + q["b2"]
        hfeat = hfeat @ q["w3"] + q["b3"]                              # x1
        g1 = a @ (hfeat @ q["wc1"]) + q["bc1"]                         # conv1 (pre-relu)
        re1 = hfeat[root_index][batch]                                 # root_extend(x1)
        hcat = jnp.maximum(jnp.concatenate([g1, re1], axis=1), 0.0)
        g2 = jnp.maximum(a @ (hcat @ q["wc2"]) + q["bc2"], 0.0)        # conv2 + relu
        re2 = g1[root_index][batch]                                    # root_extend(x2)
        return p @ jnp.concatenate([g2, re2], axis=1)                  # scatter_mean

    td = block(a_td, params["td"])
    bu = block(a_bu, params["bu"])
    return jnp.concatenate([td, bu], axis=1) @ params["fc"]["w"] + params["fc"]["b"]


# ----------------------------------- main --------------------------------------

if __name__ == "__main__":
    # BiGCN(in_channels=4, hidden_size=16, out_channels=16, out_dim=8), eval mode.
    C, H, O, OUT_DIM = 4, 16, 16, 8
    NUM_GRAPHS, NODES_PER_GRAPH = 4, 8
    N = NUM_GRAPHS * NODES_PER_GRAPH                      # 32 nodes total

    key = jax.random.PRNGKey(0)
    k_x, k_td, k_bu, k_fc = jax.random.split(key, 4)

    # Node features (N, 1); per-graph tree: 0->1, 0->2, 1->3, 1->4, 2->5, 2->6, 3->7.
    x = jax.random.normal(k_x, (N, 1), jnp.float32)
    tree = [(0, 1), (0, 2), (1, 3), (1, 4), (2, 5), (2, 6), (3, 7)]
    src, dst = [], []
    for g in range(NUM_GRAPHS):
        base = g * NODES_PER_GRAPH
        for s_, d_ in tree:
            src.append(base + s_)
            dst.append(base + d_)
    edge_index = jnp.array([src, dst], dtype=jnp.int32)                # (2, E)
    batch = jnp.repeat(jnp.arange(NUM_GRAPHS, dtype=jnp.int32), NODES_PER_GRAPH)
    root_index = jnp.arange(NUM_GRAPHS, dtype=jnp.int32) * NODES_PER_GRAPH

    # Dense normalized adjacencies; quantize once to bf16 values so the kernel
    # (which streams A_hat as bf16) and the f32 reference see identical A_hat.
    a_td = build_norm_adj(edge_index, N).astype(jnp.bfloat16).astype(jnp.float32)
    a_bu = build_norm_adj(edge_index[::-1], N).astype(jnp.bfloat16).astype(jnp.float32)

    params = {
        "td": init_block_params(k_td, C, H, O),
        "bu": init_block_params(k_bu, C, H, O),
        "fc": init_fc_params(k_fc, H, O, OUT_DIM),
    }

    out = bigcn_forward(x, a_td, a_bu, batch, root_index, params)
    out = jax.block_until_ready(out)

    ref = bigcn_ref(x, a_td, a_bu, batch, root_index, NUM_GRAPHS, params)
    assert out.shape == (NUM_GRAPHS, OUT_DIM)
    # Kernel runs x1 / z / A_hat in bf16 (f32 accumulate) vs. the literal f32
    # reference, so allow a few-percent tolerance.
    max_err = float(jnp.max(jnp.abs(out - ref)))
    assert jnp.allclose(out, ref, atol=5e-2, rtol=5e-2), max_err

    print("KERNEL_OK")
</pallas_src>

<mosaic_0001>
module attributes {stable_mosaic.version = 11 : i64} {
  func.func @bigcn_kernel(%arg0: i32, %arg1: i32, %arg2: i32, %arg3: memref<1x32x32xbf16, #tpu.memory_space<vmem>>, %arg4: memref<1x32x4xbf16, #tpu.memory_space<vmem>>, %arg5: memref<1x32x4xf32, #tpu.memory_space<vmem>>, %arg6: memref<4x32xf32, #tpu.memory_space<vmem>>, %arg7: memref<4x32xf32, #tpu.memory_space<vmem>>, %arg8: memref<1x4x16xf32, #tpu.memory_space<vmem>>, %arg9: memref<1x1x16xf32, #tpu.memory_space<vmem>>, %arg10: memref<1x16x16xf32, #tpu.memory_space<vmem>>, %arg11: memref<1x4x16xf32, #tpu.memory_space<vmem>>, %arg12: memref<1x1x16xf32, #tpu.memory_space<vmem>>, %arg13: memref<1x16x8xf32, #tpu.memory_space<vmem>>, %arg14: memref<1x16x8xf32, #tpu.memory_space<vmem>>, %arg15: memref<1x4x8xf32, #tpu.memory_space<vmem>>, %arg16: memref<32x16xbf16, #tpu.memory_space<vmem>>, %arg17: memref<4x16xf32, #tpu.memory_space<vmem>>, %arg18: memref<4x16xf32, #tpu.memory_space<vmem>>) attributes {dimension_semantics = [#tpu.dimension_semantics<parallel>, #tpu.dimension_semantics<arbitrary>, #tpu.dimension_semantics<arbitrary>], iteration_bounds = array<i64: 2, 2, 1>, scalar_prefetch = 0 : i64, scratch_operands = 3 : i64, tpu.core_type = #tpu.core_type<tc>, window_params = [{transform_indices = @transform_0, window_bounds = array<i64: 1, 32, 32>}, {transform_indices = @transform_1, window_bounds = array<i64: 1, 32, 4>}, {transform_indices = @transform_2, window_bounds = array<i64: 1, 32, 4>}, {transform_indices = @transform_3, window_bounds = array<i64: 4, 32>}, {transform_indices = @transform_4, window_bounds = array<i64: 4, 32>}, {transform_indices = @transform_5, window_bounds = array<i64: 1, 4, 16>}, {transform_indices = @transform_6, window_bounds = array<i64: 1, 1, 16>}, {transform_indices = @transform_7, window_bounds = array<i64: 1, 16, 16>}, {transform_indices = @transform_8, window_bounds = array<i64: 1, 4, 16>}, {transform_indices = @transform_9, window_bounds = array<i64: 1, 1, 16>}, {transform_indices = @transform_10, window_bounds = array<i64: 1, 16, 8>}, {transform_indices = @transform_11, window_bounds = array<i64: 1, 16, 8>}, {transform_indices = @transform_12, window_bounds = array<i64: 1, 4, 8>}]} {
    %c32_i32 = arith.constant 32 : i32
    %0 = arith.muli %arg2, %c32_i32 : i32
    %1 = tpu.assume_multiple %0, 32 : i32
    %c0_i32 = arith.constant 0 : i32
    %2 = arith.cmpi eq, %arg1, %c0_i32 : i32
    %c0_i32_0 = arith.constant 0 : i32
    %3 = arith.cmpi eq, %arg2, %c0_i32_0 : i32
    %4 = arith.andi %2, %3 : i1
    %5 = arith.extui %4 : i1 to i32
    %c0_i32_1 = arith.constant 0 : i32
    %6 = arith.cmpi ne, %5, %c0_i32_1 : i32
    scf.if %6 {
      %cst = arith.constant 0.000000e+00 : f32
      %18 = vector.broadcast %cst : f32 to vector<4x16xf32>
      %c0 = arith.constant 0 : index
      %c0_8 = arith.constant 0 : index
      %19 = vector.load %arg17[%c0, %c0_8] : memref<4x16xf32, #tpu.memory_space<vmem>>, vector<4x16xf32>
      tpu.vector_store %arg17[%c0, %c0_8], %18 {strides = array<i32>} : memref<4x16xf32, #tpu.memory_space<vmem>>, vector<4x16xf32>,
      %cst_9 = arith.constant 0.000000e+00 : f32
      %20 = vector.broadcast %cst_9 : f32 to vector<4x16xf32>
      %c0_10 = arith.constant 0 : index
      %c0_11 = arith.constant 0 : index
      %21 = vector.load %arg18[%c0_10, %c0_11] : memref<4x16xf32, #tpu.memory_space<vmem>>, vector<4x16xf32>
      tpu.vector_store %arg18[%c0_10, %c0_11], %20 {strides = array<i32>} : memref<4x16xf32, #tpu.memory_space<vmem>>, vector<4x16xf32>,
    } else {
    }
    %c0_i32_2 = arith.constant 0 : i32
    %7 = arith.cmpi eq, %arg1, %c0_i32_2 : i32
    %8 = arith.extui %7 : i1 to i32
    %c0_i32_3 = arith.constant 0 : i32
    %9 = arith.cmpi ne, %8, %c0_i32_3 : i32
    scf.if %9 {
      %c0 = arith.constant 0 : index
      %18 = arith.index_cast %1 : i32 to index
      %c0_8 = arith.constant 0 : index
      %19 = vector.load %arg3[%c0, %18, %c0_8] : memref<1x32x32xbf16, #tpu.memory_space<vmem>>, vector<1x32x32xbf16>
      %20 = vector.shape_cast %19 : vector<1x32x32xbf16> to vector<32x32xbf16>
      %c0_9 = arith.constant 0 : index
      %c0_10 = arith.constant 0 : index
      %c0_11 = arith.constant 0 : index
      %21 = vector.load %arg4[%c0_9, %c0_10, %c0_11] : memref<1x32x4xbf16, #tpu.memory_space<vmem>>, vector<1x32x4xbf16>
      %22 = vector.shape_cast %21 : vector<1x32x4xbf16> to vector<32x4xbf16>
      %cst = arith.constant dense<0.000000e+00> : vector<32x4xf32>
      %23 = tpu.matmul %20, %22, %cst {dimension_numbers = #tpu.dot_dimension_numbers<[1], [0], [0], [1], [0, 0, 1, 1], [], []>} : vector<32x32xbf16>, vector<32x4xbf16>, vector<32x4xf32> -> vector<32x4xf32>
      %c0_12 = arith.constant 0 : index
      %c0_13 = arith.constant 0 : index
      %c0_14 = arith.constant 0 : index
      %24 = vector.load %arg8[%c0_12, %c0_13, %c0_14] : memref<1x4x16xf32, #tpu.memory_space<vmem>>, vector<1x4x16xf32>
      %25 = vector.shape_cast %24 : vector<1x4x16xf32> to vector<4x16xf32>
      %cst_15 = arith.constant dense<0.000000e+00> : vector<32x16xf32>
      %26 = tpu.matmul %23, %25, %cst_15 {dimension_numbers = #tpu.dot_dimension_numbers<[1], [0], [0], [1], [0, 0, 1, 1], [], []>} : vector<32x4xf32>, vector<4x16xf32>, vector<32x16xf32> -> vector<32x16xf32>
      %c0_16 = arith.constant 0 : index
      %c0_17 = arith.constant 0 : index
      %c0_18 = arith.constant 0 : index
      %27 = vector.load %arg9[%c0_16, %c0_17, %c0_18] : memref<1x1x16xf32, #tpu.memory_space<vmem>>, vector<1x1x16xf32>
      %28 = vector.shape_cast %27 : vector<1x1x16xf32> to vector<1x16xf32>
      %29 = vector.broadcast %28 : vector<1x16xf32> to vector<32x16xf32>
      %30 = arith.addf %26, %29 : vector<32x16xf32>
      %cst_19 = arith.constant 0.000000e+00 : f32
      %31 = vector.broadcast %cst_19 : f32 to vector<32x16xf32>
      %32 = arith.maximumf %30, %31 : vector<32x16xf32>
      %c0_20 = arith.constant 0 : index
      %c0_21 = arith.constant 0 : index
      %c0_22 = arith.constant 0 : index
      %33 = vector.load %arg10[%c0_20, %c0_21, %c0_22] : memref<1x16x16xf32, #tpu.memory_space<vmem>>, vector<1x16x16xf32>
      %34 = vector.shape_cast %33 : vector<1x16x16xf32> to vector<16x16xf32>
      %cst_23 = arith.constant dense<0.000000e+00> : vector<32x16xf32>
      %35 = tpu.matmul %32, %34, %cst_23 {dimension_numbers = #tpu.dot_dimension_numbers<[1], [0], [0], [1], [0, 0, 1, 1], [], []>} : vector<32x16xf32>, vector<16x16xf32>, vector<32x16xf32> -> vector<32x16xf32>
      %c0_24 = arith.constant 0 : index
      %c0_25 = arith.constant 0 : index
      %c0_26 = arith.constant 0 : index
      %36 = vector.load %arg5[%c0_24, %c0_25, %c0_26] : memref<1x32x4xf32, #tpu.memory_space<vmem>>, vector<1x32x4xf32>
      %37 = vector.shape_cast %36 : vector<1x32x4xf32> to vector<32x4xf32>
      %cst_27 = arith.constant 0.000000e+00 : f32
      %38 = vector.broadcast %cst_27 : f32 to vector<32x4xf32>
      %39 = arith.maximumf %37, %38 : vector<32x4xf32>
      %c0_28 = arith.constant 0 : index
      %c0_29 = arith.constant 0 : index
      %c0_30 = arith.constant 0 : index
      %40 = vector.load %arg11[%c0_28, %c0_29, %c0_30] : memref<1x4x16xf32, #tpu.memory_space<vmem>>, vector<1x4x16xf32>
      %41 = vector.shape_cast %40 : vector<1x4x16xf32> to vector<4x16xf32>
      %cst_31 = arith.constant dense<0.000000e+00> : vector<32x16xf32>
      %42 = tpu.matmul %39, %41, %cst_31 {dimension_numbers = #tpu.dot_dimension_numbers<[1], [0], [0], [1], [0, 0, 1, 1], [], []>} : vector<32x4xf32>, vector<4x16xf32>, vector<32x16xf32> -> vector<32x16xf32>
      %43 = arith.addf %35, %42 : vector<32x16xf32>
      %44 = arith.truncf %43 : vector<32x16xf32> to vector<32x16xbf16>
      %45 = arith.index_cast %1 : i32 to index
      %c0_32 = arith.constant 0 : index
      %46 = vector.load %arg16[%45, %c0_32] : memref<32x16xbf16, #tpu.memory_space<vmem>>, vector<32x16xbf16>
      tpu.vector_store %arg16[%45, %c0_32], %44 {strides = array<i32>} : memref<32x16xbf16, #tpu.memory_space<vmem>>, vector<32x16xbf16>,
      %c0_33 = arith.constant 0 : index
      %c0_34 = arith.constant 0 : index
      %47 = vector.load %arg18[%c0_33, %c0_34] : memref<4x16xf32, #tpu.memory_space<vmem>>, vector<4x16xf32>
      %c0_35 = arith.constant 0 : index
      %c0_36 = arith.constant 0 : index
      %48 = vector.load %arg7[%c0_35, %c0_36] : memref<4x32xf32, #tpu.memory_space<vmem>>, vector<4x32xf32>
      %cst_37 = arith.constant dense<0.000000e+00> : vector<4x16xf32>
      %49 = tpu.matmul %48, %30, %cst_37 {dimension_numbers = #tpu.dot_dimension_numbers<[1], [0], [0], [1], [0, 0, 1, 1], [], []>} : vector<4x32xf32>, vector<32x16xf32>, vector<4x16xf32> -> vector<4x16xf32>
      %50 = arith.addf %47, %49 : vector<4x16xf32>
      %c0_38 = arith.constant 0 : index
      %c0_39 = arith.constant 0 : index
      %51 = vector.load %arg18[%c0_38, %c0_39] : memref<4x16xf32, #tpu.memory_space<vmem>>, vector<4x16xf32>
      tpu.vector_store %arg18[%c0_38, %c0_39], %50 {strides = array<i32>} : memref<4x16xf32, #tpu.memory_space<vmem>>, vector<4x16xf32>,
    } else {
    }
    %c1_i32 = arith.constant 1 : i32
    %10 = arith.cmpi eq, %arg1, %c1_i32 : i32
    %11 = arith.extui %10 : i1 to i32
    %c0_i32_4 = arith.constant 0 : i32
    %12 = arith.cmpi ne, %11, %c0_i32_4 : i32
    scf.if %12 {
      %c0 = arith.constant 0 : index
      %18 = arith.index_cast %1 : i32 to index
      %c0_8 = arith.constant 0 : index
      %19 = vector.load %arg3[%c0, %18, %c0_8] : memref<1x32x32xbf16, #tpu.memory_space<vmem>>, vector<1x32x32xbf16>
      %20 = vector.shape_cast %19 : vector<1x32x32xbf16> to vector<32x32xbf16>
      %c0_9 = arith.constant 0 : index
      %c0_10 = arith.constant 0 : index
      %21 = vector.load %arg16[%c0_9, %c0_10] : memref<32x16xbf16, #tpu.memory_space<vmem>>, vector<32x16xbf16>
      %cst = arith.constant dense<0.000000e+00> : vector<32x16xf32>
      %22 = tpu.matmul %20, %21, %cst {dimension_numbers = #tpu.dot_dimension_numbers<[1], [0], [0], [1], [0, 0, 1, 1], [], []>} : vector<32x32xbf16>, vector<32x16xbf16>, vector<32x16xf32> -> vector<32x16xf32>
      %c0_11 = arith.constant 0 : index
      %c0_12 = arith.constant 0 : index
      %c0_13 = arith.constant 0 : index
      %23 = vector.load %arg12[%c0_11, %c0_12, %c0_13] : memref<1x1x16xf32, #tpu.memory_space<vmem>>, vector<1x1x16xf32>
      %24 = vector.shape_cast %23 : vector<1x1x16xf32> to vector<1x16xf32>
      %25 = vector.broadcast %24 : vector<1x16xf32> to vector<32x16xf32>
      %26 = arith.addf %22, %25 : vector<32x16xf32>
      %cst_14 = arith.constant 0.000000e+00 : f32
      %27 = vector.broadcast %cst_14 : f32 to vector<32x16xf32>
      %28 = arith.maximumf %26, %27 : vector<32x16xf32>
      %c0_15 = arith.constant 0 : index
      %c0_16 = arith.constant 0 : index
      %29 = vector.load %arg17[%c0_15, %c0_16] : memref<4x16xf32, #tpu.memory_space<vmem>>, vector<4x16xf32>
      %c0_17 = arith.constant 0 : index
      %c0_18 = arith.constant 0 : index
      %30 = vector.load %arg6[%c0_17, %c0_18] : memref<4x32xf32, #tpu.memory_space<vmem>>, vector<4x32xf32>
      %cst_19 = arith.constant dense<0.000000e+00> : vector<4x16xf32>
      %31 = tpu.matmul %30, %28, %cst_19 {dimension_numbers = #tpu.dot_dimension_numbers<[1], [0], [0], [1], [0, 0, 1, 1], [], []>} : vector<4x32xf32>, vector<32x16xf32>, vector<4x16xf32> -> vector<4x16xf32>
      %32 = arith.addf %29, %31 : vector<4x16xf32>
      %c0_20 = arith.constant 0 : index
      %c0_21 = arith.constant 0 : index
      %33 = vector.load %arg17[%c0_20, %c0_21] : memref<4x16xf32, #tpu.memory_space<vmem>>, vector<4x16xf32>
      tpu.vector_store %arg17[%c0_20, %c0_21], %32 {strides = array<i32>} : memref<4x16xf32, #tpu.memory_space<vmem>>, vector<4x16xf32>,
    } else {
    }
    %c1_i32_5 = arith.constant 1 : i32
    %13 = arith.cmpi eq, %arg1, %c1_i32_5 : i32
    %c0_i32_6 = arith.constant 0 : i32
    %14 = arith.cmpi eq, %arg2, %c0_i32_6 : i32
    %15 = arith.andi %13, %14 : i1
    %16 = arith.extui %15 : i1 to i32
    %c0_i32_7 = arith.constant 0 : i32
    %17 = arith.cmpi ne, %16, %c0_i32_7 : i32
    scf.if %17 {
      %c0 = arith.constant 0 : index
      %c0_8 = arith.constant 0 : index
      %18 = vector.load %arg17[%c0, %c0_8] : memref<4x16xf32, #tpu.memory_space<vmem>>, vector<4x16xf32>
      %c0_9 = arith.constant 0 : index
      %c0_10 = arith.constant 0 : index
      %c0_11 = arith.constant 0 : index
      %19 = vector.load %arg13[%c0_9, %c0_10, %c0_11] : memref<1x16x8xf32, #tpu.memory_space<vmem>>, vector<1x16x8xf32>
      %20 = vector.shape_cast %19 : vector<1x16x8xf32> to vector<16x8xf32>
      %cst = arith.constant dense<0.000000e+00> : vector<4x8xf32>
      %21 = tpu.matmul %18, %20, %cst {dimension_numbers = #tpu.dot_dimension_numbers<[1], [0], [0], [1], [0, 0, 1, 1], [], []>} : vector<4x16xf32>, vector<16x8xf32>, vector<4x8xf32> -> vector<4x8xf32>
      %c0_12 = arith.constant 0 : index
      %c0_13 = arith.constant 0 : index
      %22 = vector.load %arg18[%c0_12, %c0_13] : memref<4x16xf32, #tpu.memory_space<vmem>>, vector<4x16xf32>
      %c0_14 = arith.constant 0 : index
      %c0_15 = arith.constant 0 : index
      %c0_16 = arith.constant 0 : index
      %23 = vector.load %arg14[%c0_14, %c0_15, %c0_16] : memref<1x16x8xf32, #tpu.memory_space<vmem>>, vector<1x16x8xf32>
      %24 = vector.shape_cast %23 : vector<1x16x8xf32> to vector<16x8xf32>
      %cst_17 = arith.constant dense<0.000000e+00> : vector<4x8xf32>
      %25 = tpu.matmul %22, %24, %cst_17 {dimension_numbers = #tpu.dot_dimension_numbers<[1], [0], [0], [1], [0, 0, 1, 1], [], []>} : vector<4x16xf32>, vector<16x8xf32>, vector<4x8xf32> -> vector<4x8xf32>
      %26 = arith.addf %21, %25 : vector<4x8xf32>
      %c0_18 = arith.constant 0 : index
      %c0_19 = arith.constant 0 : index
      %c0_20 = arith.constant 0 : index
      %27 = vector.load %arg15[%c0_18, %c0_19, %c0_20] : memref<1x4x8xf32, #tpu.memory_space<vmem>>, vector<1x4x8xf32>
      %28 = vector.shape_cast %27 : vector<1x4x8xf32> to vector<4x8xf32>
      %29 = vector.shape_cast %26 : vector<4x8xf32> to vector<1x4x8xf32>
      tpu.vector_store %arg15[%c0_18, %c0_19, %c0_20], %29 {strides = array<i32>} : memref<1x4x8xf32, #tpu.memory_space<vmem>>, vector<1x4x8xf32>,
    } else {
    }
    return
  }
  func.func @transform_0(%arg0: i32, %arg1: i32, %arg2: i32) -> (i32, i32, i32) {
    %c0_i32 = arith.constant 0 : i32
    %c0_i32_0 = arith.constant 0 : i32
    %c0_i32_1 = arith.constant 0 : i32
    return %arg0, %c0_i32, %c0_i32_0 : i32, i32, i32
  }
  func.func @transform_1(%arg0: i32, %arg1: i32, %arg2: i32) -> (i32, i32, i32) {
    %c0_i32 = arith.constant 0 : i32
    %c0_i32_0 = arith.constant 0 : i32
    %c0_i32_1 = arith.constant 0 : i32
    return %arg0, %c0_i32, %c0_i32_0 : i32, i32, i32
  }
  func.func @transform_2(%arg0: i32, %arg1: i32, %arg2: i32) -> (i32, i32, i32) {
    %c0_i32 = arith.constant 0 : i32
    %c0_i32_0 = arith.constant 0 : i32
    return %arg0, %arg2, %c0_i32 : i32, i32, i32
  }
  func.func @transform_3(%arg0: i32, %arg1: i32, %arg2: i32) -> (i32, i32) {
    %c0_i32 = arith.constant 0 : i32
    %c0_i32_0 = arith.constant 0 : i32
    return %c0_i32, %arg2 : i32, i32
  }
  func.func @transform_4(%arg0: i32, %arg1: i32, %arg2: i32) -> (i32, i32) {
    %c0_i32 = arith.constant 0 : i32
    %c0_i32_0 = arith.constant 0 : i32
    return %c0_i32, %arg2 : i32, i32
  }
  func.func @transform_5(%arg0: i32, %arg1: i32, %arg2: i32) -> (i32, i32, i32) {
    %c0_i32 = arith.constant 0 : i32
    %c0_i32_0 = arith.constant 0 : i32
    %c0_i32_1 = arith.constant 0 : i32
    return %arg0, %c0_i32, %c0_i32_0 : i32, i32, i32
  }
  func.func @transform_6(%arg0: i32, %arg1: i32, %arg2: i32) -> (i32, i32, i32) {
    %c0_i32 = arith.constant 0 : i32
    %c0_i32_0 = arith.constant 0 : i32
    %c0_i32_1 = arith.constant 0 : i32
    return %arg0, %c0_i32, %c0_i32_0 : i32, i32, i32
  }
  func.func @transform_7(%arg0: i32, %arg1: i32, %arg2: i32) -> (i32, i32, i32) {
    %c0_i32 = arith.constant 0 : i32
    %c0_i32_0 = arith.constant 0 : i32
    %c0_i32_1 = arith.constant 0 : i32
    return %arg0, %c0_i32, %c0_i32_0 : i32, i32, i32
  }
  func.func @transform_8(%arg0: i32, %arg1: i32, %arg2: i32) -> (i32, i32, i32) {
    %c0_i32 = arith.constant 0 : i32
    %c0_i32_0 = arith.constant 0 : i32
    %c0_i32_1 = arith.constant 0 : i32
    return %arg0, %c0_i32, %c0_i32_0 : i32, i32, i32
  }
  func.func @transform_9(%arg0: i32, %arg1: i32, %arg2: i32) -> (i32, i32, i32) {
    %c0_i32 = arith.constant 0 : i32
    %c0_i32_0 = arith.constant 0 : i32
    %c0_i32_1 = arith.constant 0 : i32
    return %arg0, %c0_i32, %c0_i32_0 : i32, i32, i32
  }
  func.func @transform_10(%arg0: i32, %arg1: i32, %arg2: i32) -> (i32, i32, i32) {
    %c0_i32 = arith.constant 0 : i32
    %c0_i32_0 = arith.constant 0 : i32
    %c0_i32_1 = arith.constant 0 : i32
    return %arg0, %c0_i32, %c0_i32_0 : i32, i32, i32
  }
  func.func @transform_11(%arg0: i32, %arg1: i32, %arg2: i32) -> (i32, i32, i32) {
    %c0_i32 = arith.constant 0 : i32
    %c0_i32_0 = arith.constant 0 : i32
    %c0_i32_1 = arith.constant 0 : i32
    return %arg0, %c0_i32, %c0_i32_0 : i32, i32, i32
  }
  func.func @transform_12(%arg0: i32, %arg1: i32, %arg2: i32) -> (i32, i32, i32) {
    %c0_i32 = arith.constant 0 : i32
    %c0_i32_0 = arith.constant 0 : i32
    %c0_i32_1 = arith.constant 0 : i32
    return %arg0, %c0_i32, %c0_i32_0 : i32, i32, i32
  }
}

</mosaic_0001>

<llo_original>
// kernel: tpu_custom_call.1
$region0: #{tpu_custom_call.1}
  #allocation0 [shape = 'u32[]', space=smem, size = 0x4, offset = 0x4, fixed_abs, tag = 'smem constant byte address 0x4 - core index']
  #allocation1 [shape = 'u32[72,128]{1,0:T(1,128)}', space=vmem, size = 0x9000, scoped, tag = 'internal scratch']
  #allocation2 [shape = 'bf16[32,16]{1,0:T(8,128)(2,1)}', space=vmem, size = 0x2000, scoped, tag = 'scratch operand']
  #allocation3 [shape = 'f32[4,16]{1,0:T(4,128)}', space=vmem, size = 0x800, scoped, tag = 'scratch operand']
  #allocation4 [shape = 'f32[4,16]{1,0:T(4,128)}', space=vmem, size = 0x800, scoped, tag = 'scratch operand']
  %s0 = inlined_call_operand.vmem [shape: bf16[2,32,32], index: 0, kind: input, shape index: {}]
  %s1 = inlined_call_operand.vmem [shape: bf16[2,32,4], index: 1, kind: input, shape index: {}]
  %s2 = inlined_call_operand.vmem [shape: f32[2,32,4], index: 2, kind: input, shape index: {}]
  %s3 = inlined_call_operand.vmem [shape: f32[4,32], index: 3, kind: input, shape index: {}]
  %s4 = inlined_call_operand.vmem [shape: f32[4,32], index: 4, kind: input, shape index: {}]
  %s5 = inlined_call_operand.vmem [shape: f32[2,4,16], index: 5, kind: input, shape index: {}]
  %s6 = inlined_call_operand.vmem [shape: f32[2,1,16], index: 6, kind: input, shape index: {}]
  %s7 = inlined_call_operand.vmem [shape: f32[2,16,16], index: 7, kind: input, shape index: {}]
  %s8 = inlined_call_operand.vmem [shape: f32[2,4,16], index: 8, kind: input, shape index: {}]
  %s9 = inlined_call_operand.vmem [shape: f32[2,1,16], index: 9, kind: input, shape index: {}]
  %s10 = inlined_call_operand.vmem [shape: f32[2,16,8], index: 10, kind: input, shape index: {}]
  %s11 = inlined_call_operand.vmem [shape: f32[2,16,8], index: 11, kind: input, shape index: {}]
  %s12 = inlined_call_operand.hbm [shape: f32[2,4,8], index: 12, kind: output, shape index: {}]
  %s13 = sld [smem:[#allocation0]]
  $region97: #{tpu_custom_call.1} parent=0
    _
  %s15 = ssub.s32 1, %s13
  %s16 = scalar_select 0, %s15, %s13
  $region1: #{tpu_custom_call.1} parent=0
    #allocation5 [shape = 'u8[4096]{0}', space=vmem, size = 0x1000, scoped, tag = 'output window, operand 0']
    #allocation6 [shape = 's32[2]{0}', space=sflag, size = 0x8, scoped, tag = 'scoped memory for tpu_custom_call.1']
    %17 = vsyncpa [#allocation6], 0
    %s18 = scalar_lea.sflag [#allocation6], 1
    %19 = vsyncpa %s18, 0
    loop: start=0, step=1, limit=6
    $region2: #{tpu_custom_call.1} parent=1 // loop_pre_header
      _
    $region3: #{tpu_custom_call.1} parent=1 // loop_header
      %s21 = sphi 0, %s25
      %p22 = scmp.ge.s32.totalorder %s21, 6
      %s28 = sphi 0, %s47
      %s29 = sphi 0, %s43
      %s30 = sphi 0, %s39
      %s31 = sphi 0, %s28
      %s32 = sphi 0, %s29
      %s33 = sphi 0, %s30
      %s34 = sphi 0, %s31
      %s35 = sphi 0, %s32
      %s36 = sphi 0, %s33
      %s50 = sphi 0, %s52
      %s53 = sphi 0, %s50
      %s54 = sphi 0, %s53
      %s70 = sphi 0, %s54
      %s76 = sphi 0, %s78
      %s79 = sphi 0, %s76
      %s80 = sphi 0, %s79
      %s96 = sphi 0, %s80
      %s104 = sphi 0, %s106
      %s107 = sphi 0, %s104
      %s108 = sphi 0, %s107
      %s124 = sphi 0, %s108
      %s130 = sphi 0, %s132
      %s133 = sphi 0, %s130
      %s134 = sphi 0, %s133
      %s150 = sphi 0, %s134
      %s156 = sphi 0, %s158
      %s159 = sphi 0, %s156
      %s160 = sphi 0, %s159
      %s176 = sphi 0, %s160
      %s182 = sphi 0, %s184
      %s185 = sphi 0, %s182
      %s186 = sphi 0, %s185
      %s202 = sphi 0, %s186
      %s208 = sphi 0, %s210
      %s211 = sphi 0, %s208
      %s212 = sphi 0, %s211
      %s228 = sphi 0, %s212
      %s234 = sphi 0, %s236
      %s237 = sphi 0, %s234
      %s238 = sphi 0, %s237
      %s254 = sphi 0, %s238
      %s260 = sphi 0, %s262
      %s263 = sphi 0, %s260
      %s264 = sphi 0, %s263
      %s280 = sphi 0, %s264
      %s286 = sphi 0, %s288
      %s289 = sphi 0, %s286
      %s290 = sphi 0, %s289
      %s306 = sphi 0, %s290
      %s312 = sphi 0, %s314
      %s315 = sphi 0, %s312
      %s316 = sphi 0, %s315
      %s332 = sphi 0, %s316
      %s338 = sphi 0, %s340
      %s341 = sphi 0, %s338
      %s342 = sphi 0, %s341
      %s358 = sphi 0, %s342
      %s364 = sphi 0, %s366
      %s367 = sphi 0, %s364
      %s368 = sphi 0, %s367
      %s384 = sphi 0, %s368
    $region4: #{tpu_custom_call.1} parent=1 // loop_header_branch
      %24 = sbr.rel (%p22) target = $region8
    $region5: #{tpu_custom_call.1} parent=1 // loop_body
      %s26 = ssub.s32 %s21, 1
      %s27 = ssub.s32 %s21, 2
      %s37 = sadd.s32 1, %s30
      %p38 = scmp.ge.s32.totalorder %s37, 1
      %s39 = scalar_select %p38, 0, %s37
      %s40 = sadd.s32 1, %s29
      %s41 = scalar_select %p38, %s40, %s29
      %p42 = scmp.ge.s32.totalorder %s41, 2
      %s43 = scalar_select %p42, 0, %s41
      %s44 = sadd.s32 1, %s28
      %s45 = scalar_select %p42, %s44, %s28
      %p46 = scmp.ge.s32.totalorder %s45, 2
      %s47 = scalar_select %p46, 0, %s45
      %s48 = ssub.s32 %s28, %s47
      %p49 = scmp.eq.s32.totalorder %s48, 0
      %s51 = sadd.s32 %s50, 1
      %s52 = scalar_select %p49, %s50, %s51
      %p55 = pneg %p49
      %p56 = scmp.eq.s32.totalorder %s21, 3
      %p57 = por %p55, %p56
      %p58 = scmp.ne.s32.totalorder %s50, %s53
      %p59 = scmp.eq.s32.totalorder %s21, 0
      %p60 = por %p58, %p59
      %p61 = scmp.ne.s32.totalorder %s50, %s53
      %p62 = scmp.eq.s32.totalorder %s26, 3
      %p63 = por %p61, %p62
      %p64 = scmp.ne.s32.totalorder %s53, %s54
      %p65 = scmp.eq.s32.totalorder %s26, 0
      %p66 = por %p64, %p65
      %p67 = scmp.ne.s32.totalorder %s53, %s54
      %p68 = scmp.eq.s32.totalorder %s27, 3
      %p69 = por %p67, %p68
      %p71 = scmp.ne.s32.totalorder %s54, %s70
      %p72 = scmp.eq.s32.totalorder %s27, 0
      %p73 = por %p71, %p72
      %s74 = ssub.s32 %s28, %s47
      %p75 = scmp.eq.s32.totalorder %s74, 0
      %s77 = sadd.s32 %s76, 1
      %s78 = scalar_select %p75, %s76, %s77
      %p81 = pneg %p75
      %p82 = scmp.eq.s32.totalorder %s21, 3
      %p83 = por %p81, %p82
      %p84 = scmp.ne.s32.totalorder %s76, %s79
      %p85 = scmp.eq.s32.totalorder %s21, 0
      %p86 = por %p84, %p85
      %p87 = scmp.ne.s32.totalorder %s76, %s79
      %p88 = scmp.eq.s32.totalorder %s26, 3
      %p89 = por %p87, %p88
      %p90 = scmp.ne.s32.totalorder %s79, %s80
      %p91 = scmp.eq.s32.totalorder %s26, 0
      %p92 = por %p90, %p91
      %p93 = scmp.ne.s32.totalorder %s79, %s80
      %p94 = scmp.eq.s32.totalorder %s27, 3
      %p95 = por %p93, %p94
      %p97 = scmp.ne.s32.totalorder %s80, %s96
      %p98 = scmp.eq.s32.totalorder %s27, 0
      %p99 = por %p97, %p98
      %s100 = ssub.s32 %s28, %s47
      %s101 = ssub.s32 %s30, %s39
      %s102 = sor.u32 %s100, %s101
      %p103 = scmp.eq.s32.totalorder %s102, 0
      %s105 = sadd.s32 %s104, 1
      %s106 = scalar_select %p103, %s104, %s105
      %p109 = pneg %p103
      %p110 = scmp.eq.s32.totalorder %s21, 3
      %p111 = por %p109, %p110
      %p112 = scmp.ne.s32.totalorder %s104, %s107
      %p113 = scmp.eq.s32.totalorder %s21, 0
      %p114 = por %p112, %p113
      %p115 = scmp.ne.s32.totalorder %s104, %s107
      %p116 = scmp.eq.s32.totalorder %s26, 3
      %p117 = por %p115, %p116
      %p118 = scmp.ne.s32.totalorder %s107, %s108
      %p119 = scmp.eq.s32.totalorder %s26, 0
      %p120 = por %p118, %p119
      %p121 = scmp.ne.s32.totalorder %s107, %s108
      %p122 = scmp.eq.s32.totalorder %s27, 3
      %p123 = por %p121, %p122
      %p125 = scmp.ne.s32.totalorder %s108, %s124
      %p126 = scmp.eq.s32.totalorder %s27, 0
      %p127 = por %p125, %p126
      %s128 = ssub.s32 %s30, %s39
      %p129 = scmp.eq.s32.totalorder %s128, 0
      %s131 = sadd.s32 %s130, 1
      %s132 = scalar_select %p129, %s130, %s131
      %p135 = pneg %p129
      %p136 = scmp.eq.s32.totalorder %s21, 3
      %p137 = por %p135, %p136
      %p138 = scmp.ne.s32.totalorder %s130, %s133
      %p139 = scmp.eq.s32.totalorder %s21, 0
      %p140 = por %p138, %p139
      %p141 = scmp.ne.s32.totalorder %s130, %s133
      %p142 = scmp.eq.s32.totalorder %s26, 3
      %p143 = por %p141, %p142
      %p144 = scmp.ne.s32.totalorder %s133, %s134
      %p145 = scmp.eq.s32.totalorder %s26, 0
      %p146 = por %p144, %p145
      %p147 = scmp.ne.s32.totalorder %s133, %s134
      %p148 = scmp.eq.s32.totalorder %s27, 3
      %p149 = por %p147, %p148
      %p151 = scmp.ne.s32.totalorder %s134, %s150
      %p152 = scmp.eq.s32.totalorder %s27, 0
      %p153 = por %p151, %p152
      %s154 = ssub.s32 %s30, %s39
      %p155 = scmp.eq.s32.totalorder %s154, 0
      %s157 = sadd.s32 %s156, 1
      %s158 = scalar_select %p155, %s156, %s157
      %p161 = pneg %p155
      %p162 = scmp.eq.s32.totalorder %s21, 3
      %p163 = por %p161, %p162
      %p164 = scmp.ne.s32.totalorder %s156, %s159
      %p165 = scmp.eq.s32.totalorder %s21, 0
      %p166 = por %p164, %p165
      %p167 = scmp.ne.s32.totalorder %s156, %s159
      %p168 = scmp.eq.s32.totalorder %s26, 3
      %p169 = por %p167, %p168
      %p170 = scmp.ne.s32.totalorder %s159, %s160
      %p171 = scmp.eq.s32.totalorder %s26, 0
      %p172 = por %p170, %p171
      %p173 = scmp.ne.s32.totalorder %s159, %s160
      %p174 = scmp.eq.s32.totalorder %s27, 3
      %p175 = por %p173, %p174
      %p177 = scmp.ne.s32.totalorder %s160, %s176
      %p178 = scmp.eq.s32.totalorder %s27, 0
      %p179 = por %p177, %p178
      %s180 = ssub.s32 %s28, %s47
      %p181 = scmp.eq.s32.totalorder %s180, 0
      %s183 = sadd.s32 %s182, 1
      %s184 = scalar_select %p181, %s182, %s183
      %p187 = pneg %p181
      %p188 = scmp.eq.s32.totalorder %s21, 3
      %p189 = por %p187, %p188
      %p190 = scmp.ne.s32.totalorder %s182, %s185
      %p191 = scmp.eq.s32.totalorder %s21, 0
      %p192 = por %p190, %p191
      %p193 = scmp.ne.s32.totalorder %s182, %s185
      %p194 = scmp.eq.s32.totalorder %s26, 3
      %p195 = por %p193, %p194
      %p196 = scmp.ne.s32.totalorder %s185, %s186
      %p197 = scmp.eq.s32.totalorder %s26, 0
      %p198 = por %p196, %p197
      %p199 = scmp.ne.s32.totalorder %s185, %s186
      %p200 = scmp.eq.s32.totalorder %s27, 3
      %p201 = por %p199, %p200
      %p203 = scmp.ne.s32.totalorder %s186, %s202
      %p204 = scmp.eq.s32.totalorder %s27, 0
      %p205 = por %p203, %p204
      %s206 = ssub.s32 %s28, %s47
      %p207 = scmp.eq.s32.totalorder %s206, 0
      %s209 = sadd.s32 %s208, 1
      %s210 = scalar_select %p207, %s208, %s209
      %p213 = pneg %p207
      %p214 = scmp.eq.s32.totalorder %s21, 3
      %p215 = por %p213, %p214
      %p216 = scmp.ne.s32.totalorder %s208, %s211
      %p217 = scmp.eq.s32.totalorder %s21, 0
      %p218 = por %p216, %p217
      %p219 = scmp.ne.s32.totalorder %s208, %s211
      %p220 = scmp.eq.s32.totalorder %s26, 3
      %p221 = por %p219, %p220
      %p222 = scmp.ne.s32.totalorder %s211, %s212
      %p223 = scmp.eq.s32.totalorder %s26, 0
      %p224 = por %p222, %p223
      %p225 = scmp.ne.s32.totalorder %s211, %s212
      %p226 = scmp.eq.s32.totalorder %s27, 3
      %p227 = por %p225, %p226
      %p229 = scmp.ne.s32.totalorder %s212, %s228
      %p230 = scmp.eq.s32.totalorder %s27, 0
      %p231 = por %p229, %p230
      %s232 = ssub.s32 %s28, %s47
      %p233 = scmp.eq.s32.totalorder %s232, 0
      %s235 = sadd.s32 %s234, 1
      %s236 = scalar_select %p233, %s234, %s235
      %p239 = pneg %p233
      %p240 = scmp.eq.s32.totalorder %s21, 3
      %p241 = por %p239, %p240
      %p242 = scmp.ne.s32.totalorder %s234, %s237
      %p243 = scmp.eq.s32.totalorder %s21, 0
      %p244 = por %p242, %p243
      %p245 = scmp.ne.s32.totalorder %s234, %s237
      %p246 = scmp.eq.s32.totalorder %s26, 3
      %p247 = por %p245, %p246
      %p248 = scmp.ne.s32.totalorder %s237, %s238
      %p249 = scmp.eq.s32.totalorder %s26, 0
      %p250 = por %p248, %p249
      %p251 = scmp.ne.s32.totalorder %s237, %s238
      %p252 = scmp.eq.s32.totalorder %s27, 3
      %p253 = por %p251, %p252
      %p255 = scmp.ne.s32.totalorder %s238, %s254
      %p256 = scmp.eq.s32.totalorder %s27, 0
      %p257 = por %p255, %p256
      %s258 = ssub.s32 %s28, %s47
      %p259 = scmp.eq.s32.totalorder %s258, 0
      %s261 = sadd.s32 %s260, 1
      %s262 = scalar_select %p259, %s260, %s261
      %p265 = pneg %p259
      %p266 = scmp.eq.s32.totalorder %s21, 3
      %p267 = por %p265, %p266
      %p268 = scmp.ne.s32.totalorder %s260, %s263
      %p269 = scmp.eq.s32.totalorder %s21, 0
      %p270 = por %p268, %p269
      %p271 = scmp.ne.s32.totalorder %s260, %s263
      %p272 = scmp.eq.s32.totalorder %s26, 3
      %p273 = por %p271, %p272
      %p274 = scmp.ne.s32.totalorder %s263, %s264
      %p275 = scmp.eq.s32.totalorder %s26, 0
      %p276 = por %p274, %p275
      %p277 = scmp.ne.s32.totalorder %s263, %s264
      %p278 = scmp.eq.s32.totalorder %s27, 3
      %p279 = por %p277, %p278
      %p281 = scmp.ne.s32.totalorder %s264, %s280
      %p282 = scmp.eq.s32.totalorder %s27, 0
      %p283 = por %p281, %p282
      %s284 = ssub.s32 %s28, %s47
      %p285 = scmp.eq.s32.totalorder %s284, 0
      %s287 = sadd.s32 %s286, 1
      %s288 = scalar_select %p285, %s286, %s287
      %p291 = pneg %p285
      %p292 = scmp.eq.s32.totalorder %s21, 3
      %p293 = por %p291, %p292
      %p294 = scmp.ne.s32.totalorder %s286, %s289
      %p295 = scmp.eq.s32.totalorder %s21, 0
      %p296 = por %p294, %p295
      %p297 = scmp.ne.s32.totalorder %s286, %s289
      %p298 = scmp.eq.s32.totalorder %s26, 3
      %p299 = por %p297, %p298
      %p300 = scmp.ne.s32.totalorder %s289, %s290
      %p301 = scmp.eq.s32.totalorder %s26, 0
      %p302 = por %p300, %p301
      %p303 = scmp.ne.s32.totalorder %s289, %s290
      %p304 = scmp.eq.s32.totalorder %s27, 3
      %p305 = por %p303, %p304
      %p307 = scmp.ne.s32.totalorder %s290, %s306
      %p308 = scmp.eq.s32.totalorder %s27, 0
      %p309 = por %p307, %p308
      %s310 = ssub.s32 %s28, %s47
      %p311 = scmp.eq.s32.totalorder %s310, 0
      %s313 = sadd.s32 %s312, 1
      %s314 = scalar_select %p311, %s312, %s313
      %p317 = pneg %p311
      %p318 = scmp.eq.s32.totalorder %s21, 3
      %p319 = por %p317, %p318
      %p320 = scmp.ne.s32.totalorder %s312, %s315
      %p321 = scmp.eq.s32.totalorder %s21, 0
      %p322 = por %p320, %p321
      %p323 = scmp.ne.s32.totalorder %s312, %s315
      %p324 = scmp.eq.s32.totalorder %s26, 3
      %p325 = por %p323, %p324
      %p326 = scmp.ne.s32.totalorder %s315, %s316
      %p327 = scmp.eq.s32.totalorder %s26, 0
      %p328 = por %p326, %p327
      %p329 = scmp.ne.s32.totalorder %s315, %s316
      %p330 = scmp.eq.s32.totalorder %s27, 3
      %p331 = por %p329, %p330
      %p333 = scmp.ne.s32.totalorder %s316, %s332
      %p334 = scmp.eq.s32.totalorder %s27, 0
      %p335 = por %p333, %p334
      %s336 = ssub.s32 %s28, %s47
      %p337 = scmp.eq.s32.totalorder %s336, 0
      %s339 = sadd.s32 %s338, 1
      %s340 = scalar_select %p337, %s338, %s339
      %p343 = pneg %p337
      %p344 = scmp.eq.s32.totalorder %s21, 3
      %p345 = por %p343, %p344
      %p346 = scmp.ne.s32.totalorder %s338, %s341
      %p347 = scmp.eq.s32.totalorder %s21, 0
      %p348 = por %p346, %p347
      %p349 = scmp.ne.s32.totalorder %s338, %s341
      %p350 = scmp.eq.s32.totalorder %s26, 3
      %p351 = por %p349, %p350
      %p352 = scmp.ne.s32.totalorder %s341, %s342
      %p353 = scmp.eq.s32.totalorder %s26, 0
      %p354 = por %p352, %p353
      %p355 = scmp.ne.s32.totalorder %s341, %s342
      %p356 = scmp.eq.s32.totalorder %s27, 3
      %p357 = por %p355, %p356
      %p359 = scmp.ne.s32.totalorder %s342, %s358
      %p360 = scmp.eq.s32.totalorder %s27, 0
      %p361 = por %p359, %p360
      %s362 = ssub.s32 %s28, %s47
      %p363 = scmp.eq.s32.totalorder %s362, 0
      %s365 = sadd.s32 %s364, 1
      %s366 = scalar_select %p363, %s364, %s365
      %p369 = pneg %p363
      %p370 = scmp.eq.s32.totalorder %s21, 3
      %p371 = por %p369, %p370
      %p372 = scmp.ne.s32.totalorder %s364, %s367
      %p373 = scmp.eq.s32.totalorder %s21, 0
      %p374 = por %p372, %p373
      %p375 = scmp.ne.s32.totalorder %s364, %s367
      %p376 = scmp.eq.s32.totalorder %s26, 3
      %p377 = por %p375, %p376
      %p378 = scmp.ne.s32.totalorder %s367, %s368
      %p379 = scmp.eq.s32.totalorder %s26, 0
      %p380 = por %p378, %p379
      %p381 = scmp.ne.s32.totalorder %s367, %s368
      %p382 = scmp.eq.s32.totalorder %s27, 3
      %p383 = por %p381, %p382
      %p385 = scmp.ne.s32.totalorder %s368, %s384
      %p386 = scmp.eq.s32.totalorder %s27, 0
      %p387 = por %p385, %p386
      %p388 = scmp.le.s32.totalorder 1, %s21
      %p389 = scmp.lt.s32.totalorder %s21, 5
      %p390 = pnand %p388, %p389
      %p391 = pneg %p390
      // Predicated region
      $region9: #{tpu_custom_call.1} parent=5 // pred_check
        _
      $region10: #{tpu_custom_call.1} parent=5 // pred_check_branch
        %393 = sbr.rel (%p390) target = $region12
      $region11: #{tpu_custom_call.1} parent=5 // pred_region
        %s394 = ssub.s32 %s21, 1
        // Predicated region
        $region13: #{tpu_custom_call.1} parent=11 // pred_check
          %p395 = pneg %p146
        $region14: #{tpu_custom_call.1} parent=11 // pred_check_branch
          %397 = sbr.rel (%p395) target = $region16
        $region15: #{tpu_custom_call.1} parent=11 // pred_region
          %p398 = scmp.lt.s32.totalorder %s33, 0
          %s399 = scalar_select %p398, %s33, 0
          %s400 = smul.addr %s399, 4
          %s401 = scalar_lea.vmem %s3, %s400
        $region16: #{tpu_custom_call.1} parent=11 // pred_fallthru
          _
        // Predicated region
        $region17: #{tpu_custom_call.1} parent=11 // pred_check
          %p402 = pneg %p172
        $region18: #{tpu_custom_call.1} parent=11 // pred_check_branch
          %404 = sbr.rel (%p402) target = $region20
        $region19: #{tpu_custom_call.1} parent=11 // pred_region
          %p405 = scmp.lt.s32.totalorder %s33, 0
          %s406 = scalar_select %p405, %s33, 0
          %s407 = smul.addr %s406, 4
          %s408 = scalar_lea.vmem %s4, %s407
        $region20: #{tpu_custom_call.1} parent=11 // pred_fallthru
          _
      $region12: #{tpu_custom_call.1} parent=5 // pred_fallthru
        _
      %p409 = scmp.lt.s32.totalorder %s21, 4
      // Predicated region
      $region21: #{tpu_custom_call.1} parent=5 // pred_check
        %p410 = pneg %p409
      $region22: #{tpu_custom_call.1} parent=5 // pred_check_branch
        %412 = sbr.rel (%p410) target = $region24
      $region23: #{tpu_custom_call.1} parent=5 // pred_region
        // Predicated region
        $region25: #{tpu_custom_call.1} parent=23 // pred_check
          %p413 = pneg %p60
        $region26: #{tpu_custom_call.1} parent=23 // pred_check_branch
          %415 = sbr.rel (%p413) target = $region28
        $region27: #{tpu_custom_call.1} parent=23 // pred_region
          %p416 = scmp.lt.s32.totalorder %s28, 1
          %s417 = scalar_select %p416, %s28, 1
          %s418 = smul.addr %s417, 4
          %s419 = smul.addr %s418, 4
          %s420 = scalar_lea.vmem %s0, %s419
        $region28: #{tpu_custom_call.1} parent=23 // pred_fallthru
          _
        // Predicated region
        $region29: #{tpu_custom_call.1} parent=23 // pred_check
          %p421 = pneg %p86
        $region30: #{tpu_custom_call.1} parent=23 // pred_check_branch
          %423 = sbr.rel (%p421) target = $region32
        $region31: #{tpu_custom_call.1} parent=23 // pred_region
          %p424 = scmp.lt.s32.totalorder %s28, 1
          %s425 = scalar_select %p424, %s28, 1
          %s426 = smul.addr %s425, 4
          %s427 = smul.addr %s426, 4
          %s428 = scalar_lea.vmem %s1, %s427
        $region32: #{tpu_custom_call.1} parent=23 // pred_fallthru
          _
        // Predicated region
        $region33: #{tpu_custom_call.1} parent=23 // pred_check
          %p429 = pneg %p114
        $region34: #{tpu_custom_call.1} parent=23 // pred_check_branch
          %431 = sbr.rel (%p429) target = $region36
        $region35: #{tpu_custom_call.1} parent=23 // pred_region
          %s432 = smul.u32 4, %s30
          %p433 = scmp.lt.s32.totalorder %s28, 1
          %s434 = scalar_select %p433, %s28, 1
          %p435 = scmp.lt.s32.totalorder %s432, 3
          %s436 = scalar_select %p435, %s432, 3
          %s437 = smul.addr %s434, 4
          %s438 = sadd.s32 %s436, %s437
          %s439 = smul.addr %s438, 8
          %s440 = scalar_lea.vmem %s2, %s439
          %s441 = smul.u32 4, %s30
        $region36: #{tpu_custom_call.1} parent=23 // pred_fallthru
          _
        // Predicated region
        $region37: #{tpu_custom_call.1} parent=23 // pred_check
          %p442 = pneg %p192
        $region38: #{tpu_custom_call.1} parent=23 // pred_check_branch
          %444 = sbr.rel (%p442) target = $region40
        $region39: #{tpu_custom_call.1} parent=23 // pred_region
          %p445 = scmp.lt.s32.totalorder %s28, 1
          %s446 = scalar_select %p445, %s28, 1
          %s447 = smul.addr %s446, 4
          %s448 = scalar_lea.vmem %s5, %s447
        $region40: #{tpu_custom_call.1} parent=23 // pred_fallthru
          _
        // Predicated region
        $region41: #{tpu_custom_call.1} parent=23 // pred_check
          %p449 = pneg %p218
        $region42: #{tpu_custom_call.1} parent=23 // pred_check_branch
          %451 = sbr.rel (%p449) target = $region44
        $region43: #{tpu_custom_call.1} parent=23 // pred_region
          %p452 = scmp.lt.s32.totalorder %s28, 1
          %s453 = scalar_select %p452, %s28, 1
          %s454 = scalar_lea.vmem %s6, %s453
        $region44: #{tpu_custom_call.1} parent=23 // pred_fallthru
          _
        // Predicated region
        $region45: #{tpu_custom_call.1} parent=23 // pred_check
          %p455 = pneg %p244
        $region46: #{tpu_custom_call.1} parent=23 // pred_check_branch
          %457 = sbr.rel (%p455) target = $region48
        $region47: #{tpu_custom_call.1} parent=23 // pred_region
          %p458 = scmp.lt.s32.totalorder %s28, 1
          %s459 = scalar_select %p458, %s28, 1
          %s460 = smul.addr %s459, 2
          %s461 = smul.addr %s460, 8
          %s462 = scalar_lea.vmem %s7, %s461
        $region48: #{tpu_custom_call.1} parent=23 // pred_fallthru
          _
        // Predicated region
        $region49: #{tpu_custom_call.1} parent=23 // pred_check
          %p463 = pneg %p270
        $region50: #{tpu_custom_call.1} parent=23 // pred_check_branch
          %465 = sbr.rel (%p463) target = $region52
        $region51: #{tpu_custom_call.1} parent=23 // pred_region
          %p466 = scmp.lt.s32.totalorder %s28, 1
          %s467 = scalar_select %p466, %s28, 1
          %s468 = smul.addr %s467, 4
          %s469 = scalar_lea.vmem %s8, %s468
        $region52: #{tpu_custom_call.1} parent=23 // pred_fallthru
          _
        // Predicated region
        $region53: #{tpu_custom_call.1} parent=23 // pred_check
          %p470 = pneg %p296
        $region54: #{tpu_custom_call.1} parent=23 // pred_check_branch
          %472 = sbr.rel (%p470) target = $region56
        $region55: #{tpu_custom_call.1} parent=23 // pred_region
          %p473 = scmp.lt.s32.totalorder %s28, 1
          %s474 = scalar_select %p473, %s28, 1
          %s475 = scalar_lea.vmem %s9, %s474
        $region56: #{tpu_custom_call.1} parent=23 // pred_fallthru
          _
        // Predicated region
        $region57: #{tpu_custom_call.1} parent=23 // pred_check
          %p476 = pneg %p322
        $region58: #{tpu_custom_call.1} parent=23 // pred_check_branch
          %478 = sbr.rel (%p476) target = $region60
        $region59: #{tpu_custom_call.1} parent=23 // pred_region
          %p479 = scmp.lt.s32.totalorder %s28, 1
          %s480 = scalar_select %p479, %s28, 1
          %s481 = smul.addr %s480, 2
          %s482 = smul.addr %s481, 8
          %s483 = scalar_lea.vmem %s10, %s482
        $region60: #{tpu_custom_call.1} parent=23 // pred_fallthru
          _
        // Predicated region
        $region61: #{tpu_custom_call.1} parent=23 // pred_check
          %p484 = pneg %p348
        $region62: #{tpu_custom_call.1} parent=23 // pred_check_branch
          %486 = sbr.rel (%p484) target = $region64
        $region63: #{tpu_custom_call.1} parent=23 // pred_region
          %p487 = scmp.lt.s32.totalorder %s28, 1
          %s488 = scalar_select %p487, %s28, 1
          %s489 = smul.addr %s488, 2
          %s490 = smul.addr %s489, 8
          %s491 = scalar_lea.vmem %s11, %s490
        $region64: #{tpu_custom_call.1} parent=23 // pred_fallthru
          _
      $region24: #{tpu_custom_call.1} parent=5 // pred_fallthru
        _
      %p492 = scmp.le.s32.totalorder 1, %s21
      %p493 = scmp.lt.s32.totalorder %s21, 5
      %p494 = pnand %p492, %p493
      %p495 = pneg %p494
      // Predicated region
      $region65: #{tpu_custom_call.1} parent=5 // pred_check
        _
      $region66: #{tpu_custom_call.1} parent=5 // pred_check_branch
        %497 = sbr.rel (%p494) target = $region68
      $region67: #{tpu_custom_call.1} parent=5 // pred_region
        %s498 = ssub.s32 %s21, 1
        %p499 = scmp.lt.s32.totalorder %s31, 1
        %s500 = scalar_select %p499, %s31, 1
        %s501 = smul.addr %s500, 4
        %s502 = smul.addr %s501, 4
        %s503 = scalar_lea.vmem %s0, %s502
        %p504 = pneg %p66
        %p505 = pneg %p63
        %p506 = scmp.lt.s32.totalorder %s31, 1
        %s507 = scalar_select %p506, %s31, 1
        %s508 = smul.addr %s507, 4
        %s509 = smul.addr %s508, 4
        %s510 = scalar_lea.vmem %s1, %s509
        %p511 = pneg %p92
        %p512 = pneg %p89
        %s513 = smul.u32 4, %s33
        %p514 = scmp.lt.s32.totalorder %s31, 1
        %s515 = scalar_select %p514, %s31, 1
        %p516 = scmp.lt.s32.totalorder %s513, 3
        %s517 = scalar_select %p516, %s513, 3
        %s518 = smul.addr %s515, 4
        %s519 = sadd.s32 %s517, %s518
        %s520 = smul.addr %s519, 8
        %s521 = scalar_lea.vmem %s2, %s520
        %p522 = pneg %p120
        %p523 = pneg %p117
        %p524 = scmp.lt.s32.totalorder %s33, 0
        %s525 = scalar_select %p524, %s33, 0
        %s526 = smul.addr %s525, 4
        %s527 = scalar_lea.vmem %s3, %s526
        %p528 = pneg %p146
        %p529 = pneg %p143
        %p530 = scmp.lt.s32.totalorder %s33, 0
        %s531 = scalar_select %p530, %s33, 0
        %s532 = smul.addr %s531, 4
        %s533 = scalar_lea.vmem %s4, %s532
        %p534 = pneg %p172
        %p535 = pneg %p169
        %p536 = scmp.lt.s32.totalorder %s31, 1
        %s537 = scalar_select %p536, %s31, 1
        %s538 = smul.addr %s537, 4
        %s539 = scalar_lea.vmem %s5, %s538
        %p540 = pneg %p198
        %p541 = pneg %p195
        %p542 = scmp.lt.s32.totalorder %s31, 1
        %s543 = scalar_select %p542, %s31, 1
        %s544 = scalar_lea.vmem %s6, %s543
        %p545 = pneg %p224
        %p546 = pneg %p221
        %p547 = scmp.lt.s32.totalorder %s31, 1
        %s548 = scalar_select %p547, %s31, 1
        %s549 = smul.addr %s548, 2
        %s550 = smul.addr %s549, 8
        %s551 = scalar_lea.vmem %s7, %s550
        %p552 = pneg %p250
        %p553 = pneg %p247
        %p554 = scmp.lt.s32.totalorder %s31, 1
        %s555 = scalar_select %p554, %s31, 1
        %s556 = smul.addr %s555, 4
        %s557 = scalar_lea.vmem %s8, %s556
        %p558 = pneg %p276
        %p559 = pneg %p273
        %p560 = scmp.lt.s32.totalorder %s31, 1
        %s561 = scalar_select %p560, %s31, 1
        %s562 = scalar_lea.vmem %s9, %s561
        %p563 = pneg %p302
        %p564 = pneg %p299
        %p565 = scmp.lt.s32.totalorder %s31, 1
        %s566 = scalar_select %p565, %s31, 1
        %s567 = smul.addr %s566, 2
        %s568 = smul.addr %s567, 8
        %s569 = scalar_lea.vmem %s10, %s568
        %p570 = pneg %p328
        %p571 = pneg %p325
        %p572 = scmp.lt.s32.totalorder %s31, 1
        %s573 = scalar_select %p572, %s31, 1
        %s574 = smul.addr %s573, 2
        %s575 = smul.addr %s574, 8
        %s576 = scalar_lea.vmem %s11, %s575
        %p577 = pneg %p354
        %p578 = pneg %p351
        %p579 = pneg %p380
        %p580 = pneg %p377
        %s581 = sand.u32 %s367, 1
        %s582 = scalar_lea.sflag [#allocation6], %s581
        %s583 = sand.u32 %s367, 1
        %s584 = smul.addr %s583, 4
        %s585 = scalar_lea.vmem [#allocation5], %s584
        %p586 = scmp.lt.s32.totalorder %s31, 1
        %s587 = scalar_select %p586, %s31, 1
        %s588 = smul.addr %s587, 4
        %s589 = smul.addr %s588, 4
        %s590 = scalar_lea.vmem %s0, %s589
        %p591 = scmp.lt.s32.totalorder %s31, 1
        %s592 = scalar_select %p591, %s31, 1
        %s593 = smul.addr %s592, 4
        %s594 = smul.addr %s593, 4
        %s595 = scalar_lea.vmem %s1, %s594
        %s596 = smul.u32 4, %s33
        %p597 = scmp.lt.s32.totalorder %s31, 1
        %s598 = scalar_select %p597, %s31, 1
        %p599 = scmp.lt.s32.totalorder %s596, 3
        %s600 = scalar_select %p599, %s596, 3
        %s601 = smul.addr %s598, 4
        %s602 = sadd.s32 %s600, %s601
        %s603 = smul.addr %s602, 8
        %s604 = scalar_lea.vmem %s2, %s603
        %s605 = smul.u32 4, %s33
        %p606 = scmp.lt.s32.totalorder %s33, 0
        %s607 = scalar_select %p606, %s33, 0
        %s608 = smul.addr %s607, 4
        %s609 = scalar_lea.vmem %s3, %s608
        %p610 = scmp.lt.s32.totalorder %s33, 0
        %s611 = scalar_select %p610, %s33, 0
        %s612 = smul.addr %s611, 4
        %s613 = scalar_lea.vmem %s4, %s612
        %p614 = scmp.lt.s32.totalorder %s31, 1
        %s615 = scalar_select %p614, %s31, 1
        %s616 = smul.addr %s615, 4
        %s617 = scalar_lea.vmem %s5, %s616
        %p618 = scmp.lt.s32.totalorder %s31, 1
        %s619 = scalar_select %p618, %s31, 1
        %s620 = scalar_lea.vmem %s6, %s619
        %p621 = scmp.lt.s32.totalorder %s31, 1
        %s622 = scalar_select %p621, %s31, 1
        %s623 = smul.addr %s622, 2
        %s624 = smul.addr %s623, 8
        %s625 = scalar_lea.vmem %s7, %s624
        %p626 = scmp.lt.s32.totalorder %s31, 1
        %s627 = scalar_select %p626, %s31, 1
        %s628 = smul.addr %s627, 4
        %s629 = scalar_lea.vmem %s8, %s628
        %p630 = scmp.lt.s32.totalorder %s31, 1
        %s631 = scalar_select %p630, %s31, 1
        %s632 = scalar_lea.vmem %s9, %s631
        %p633 = scmp.lt.s32.totalorder %s31, 1
        %s634 = scalar_select %p633, %s31, 1
        %s635 = smul.addr %s634, 2
        %s636 = smul.addr %s635, 8
        %s637 = scalar_lea.vmem %s10, %s636
        %p638 = scmp.lt.s32.totalorder %s31, 1
        %s639 = scalar_select %p638, %s31, 1
        %s640 = smul.addr %s639, 2
        %s641 = smul.addr %s640, 8
        %s642 = scalar_lea.vmem %s11, %s641
        %s644 = smul.u32 %s33, 32
        %p645 = scmp.eq.s32.totalorder %s32, 0
        %p646 = scmp.eq.s32.totalorder %s33, 0
        %p647 = pnand %p645, %p646
        %p648 = pneg %p647
        // Predicated region
        $region69: #{tpu_custom_call.1} parent=67 // pred_check
          _
        $region70: #{tpu_custom_call.1} parent=67 // pred_check_branch
          %650 = sbr.rel (%p647) target = $region72
        $region71: #{tpu_custom_call.1} parent=67 // pred_region
          %vm651 = vcmask 125952
          %652 = vst.msk [vmem:[#allocation3] sm:$0xf] %vm651, 0.0
          %653 = vst.msk [vmem:[#allocation4] sm:$0xf] %vm651, 0.0
        $region72: #{tpu_custom_call.1} parent=67 // pred_fallthru
          _
        // Predicated region
        $region73: #{tpu_custom_call.1} parent=67 // pred_check
          %p654 = pneg %p645
        $region74: #{tpu_custom_call.1} parent=67 // pred_check_branch
          %656 = sbr.rel (%p654) target = $region76
        $region75: #{tpu_custom_call.1} parent=67 // pred_region
          %s657 = sshra.s32 %s644, 3
          %s658 = sand.u32 %s644, 7
          %s659 = smul.addr %s657, 4
          %s660 = scalar_lea.vmem %s590, %s659
          %v661 = vld [vmem:[%s660] sm:$0xf]
          %v662 = vld [vmem:[%s660 + $0x4] sm:$0xf]
          %v663 = vld [vmem:[%s660 + $0x8] sm:$0xf]
          %v664 = vld [vmem:[%s660 + $0xc] sm:$0xf]
          %v665 = vld [vmem:[%s595] sm:$0xf]
          %v666 = vld [vmem:[%s595 + $0x4] sm:$0xf]
          %v667 = vld [vmem:[%s595 + $0x8] sm:$0xf]
          %v668 = vld [vmem:[%s595 + $0xc] sm:$0xf]
          %v673 = vunpack.c.l.b16 %v661
          %v674 = vunpack.c.l.b16 %v662
          %v675 = vunpack.c.l.b16 %v663
          %v676 = vunpack.c.l.b16 %v664
          %v677 = vpack.c.b16 %v674, %v673
          %v678 = vpack.c.b16 %v676, %v675
          %v683 = vunpack.c.l.b16 %v665
          %v684 = vunpack.c.l.b16 %v666
          %v685 = vunpack.c.l.b16 %v667
          %v686 = vunpack.c.l.b16 %v668
          %v687 = vpack.c.b16 %v684, %v683
          %v688 = vpack.c.b16 %v686, %v685
          %vm691 = vcmask 261120
          %v693 = vsel %vm691, %v677, 0
          %v696 = vsel %vm691, %v678, 0
          %698 = vmatpush.bf16.msra.mxu0 0
          %699 = vmatpush.bf16.msra.mxu0 0
          %700 = vmatpush.bf16.msra.mxu0 0
          %701 = vmatpush.bf16.msra.mxu0 0
          %702 = vmatpush.bf16.msra.mxu0 0
          %703 = vmatpush.bf16.msra.mxu0 0
          %704 = vmatpush.bf16.msra.mxu0 %v688
          %705 = vmatpush.bf16.msra.mxu0 %v687
          %706 = vmatmul.bf16.gmra.mxu0 %v693
          %v707 = vpop.f32.mrf.mxu0
          %v708 = vadd.f32 0.0, %v707
          %v709 = vpop.f32.mrf.mxu0
          %v710 = vadd.f32 0.0, %v709
          %711 = vmatmul.bf16.gmra.mxu0 %v696
          %v712 = vpop.f32.mrf.mxu0
          %v713 = vadd.f32 0.0, %v712
          %v714 = vpop.f32.mrf.mxu0
          %v715 = vadd.f32 0.0, %v714
          %716 = vdwg.mxu0
          %v717 = vld [vmem:[%s617] sm:$0xf]
          %v718 = vld [vmem:[%s620] sm:$0x1]
          %v720 = vperm.slane %v718, 0
          %vm722 = vcmask 31744
          %v724 = vsel %vm722, %v708, 0
          %v727 = vsel %vm722, %v710, 0
          %v730 = vsel %vm722, %v713, 0
          %v733 = vsel %vm722, %v715, 0
          %vm735 = vcmask 1043456
          %v737 = vsel %vm735, %v717, 0
          %739 = vmatpush.msra.mxu0 0.0
          %740 = vmatpush.msra.mxu0 0.0
          %741 = vmatpush.msra.mxu0 0.0
          %742 = vmatpush.msra.mxu0 0.0
          %743 = vmatpush.msra.mxu0 0.0
          %744 = vmatpush.msra.mxu0 0.0
          %745 = vmatpush.msra.mxu0 0.0
          %746 = vmatpush.msra.mxu0 0.0
          %747 = vmatpush.msra.mxu0 0.0
          %748 = vmatpush.msra.mxu0 0.0
          %749 = vmatpush.msra.mxu0 0.0
          %750 = vmatpush.msra.mxu0 0.0
          %751 = vmatpush.msra.mxu0 0.0
          %752 = vmatpush.msra.mxu0 0.0
          %753 = vmatpush.msra.mxu0 0.0
          %754 = vmatpush.msra.mxu0 %v737
          %755 = vmatmul.f32.gmra.mxu0 %v724
          %v756 = vpop.f32.mrf.mxu0
          %v757 = vadd.f32 %v720, %v756
          %758 = vmatmul.f32.gmra.mxu0 %v727
          %v759 = vpop.f32.mrf.mxu0
          %v760 = vadd.f32 %v720, %v759
          %761 = vmatmul.f32.gmra.mxu0 %v730
          %v762 = vpop.f32.mrf.mxu0
          %v763 = vadd.f32 %v720, %v762
          %764 = vmatmul.f32.gmra.mxu0 %v733
          %v765 = vpop.f32.mrf.mxu0
          %v766 = vadd.f32 %v720, %v765
          %767 = vdwg.mxu0
          %v768 = vmax.f32 %v757, 0.0
          %v769 = vmax.f32 %v760, 0.0
          %v770 = vmax.f32 %v763, 0.0
          %v771 = vmax.f32 %v766, 0.0
          %v772 = vld [vmem:[%s625] sm:$0xff]
          %v773 = vld [vmem:[%s625 + $0x8] sm:$0xff]
          %v774 = vld [vmem:[%s604] sm:$0xff]
          %v775 = vld [vmem:[%s604 + $0x8] sm:$0xff]
          %v776 = vld [vmem:[%s604 + $0x10] sm:$0xff]
          %v777 = vld [vmem:[%s604 + $0x18] sm:$0xff]
          %v778 = vmax.f32 %v774, 0.0
          %v779 = vmax.f32 %v775, 0.0
          %v780 = vmax.f32 %v776, 0.0
          %v781 = vmax.f32 %v777, 0.0
          %v782 = vld [vmem:[%s629] sm:$0xf]
          %v784 = vsel %vm722, %v778, 0
          %v787 = vsel %vm722, %v779, 0
          %v790 = vsel %vm722, %v780, 0
          %v793 = vsel %vm722, %v781, 0
          %v796 = vsel %vm735, %v782, 0
          %798 = vmatpush.msra.mxu0 0.0
          %799 = vmatpush.msra.mxu0 0.0
          %800 = vmatpush.msra.mxu0 0.0
          %801 = vmatpush.msra.mxu0 0.0
          %802 = vmatpush.msra.mxu0 0.0
          %803 = vmatpush.msra.mxu0 0.0
          %804 = vmatpush.msra.mxu0 0.0
          %805 = vmatpush.msra.mxu0 0.0
          %806 = vmatpush.msra.mxu0 0.0
          %807 = vmatpush.msra.mxu0 0.0
          %808 = vmatpush.msra.mxu0 0.0
          %809 = vmatpush.msra.mxu0 0.0
          %810 = vmatpush.msra.mxu0 0.0
          %811 = vmatpush.msra.mxu0 0.0
          %812 = vmatpush.msra.mxu0 0.0
          %813 = vmatpush.msra.mxu0 %v796
          %814 = vmatmul.f32.gmra.mxu0 %v784
          %v815 = vpop.f32.mrf.mxu0
          %v816 = vadd.f32 0.0, %v815
          %817 = vmatmul.f32.gmra.mxu0 %v787
          %v818 = vpop.f32.mrf.mxu0
          %v819 = vadd.f32 0.0, %v818
          %820 = vmatmul.f32.gmra.mxu0 %v790
          %v821 = vpop.f32.mrf.mxu0
          %v822 = vadd.f32 0.0, %v821
          %823 = vmatmul.f32.gmra.mxu0 %v793
          %v824 = vpop.f32.mrf.mxu0
          %v825 = vadd.f32 0.0, %v824
          %826 = vdwg.mxu0
          %vm827 = vcmask 130048
          %v829 = vsel %vm827, %v768, 0
          %v832 = vsel %vm827, %v769, 0
          %v835 = vsel %vm827, %v770, 0
          %v838 = vsel %vm827, %v771, 0
          %840 = vmatpush.msra.mxu0 0.0
          %841 = vmatpush.msra.mxu0 0.0
          %842 = vmatpush.msra.mxu0 0.0
          %843 = vmatpush.msra.mxu0 0.0
          %844 = vmatpush.msra.mxu0 0.0
          %845 = vmatpush.msra.mxu0 0.0
          %846 = vmatpush.msra.mxu0 0.0
          %847 = vmatpush.msra.mxu0 0.0
          %848 = vmatpush.msra.mxu0 0.0
          %849 = vmatpush.msra.mxu0 0.0
          %850 = vmatpush.msra.mxu0 0.0
          %851 = vmatpush.msra.mxu0 0.0
          %852 = vmatpush.msra.mxu0 0.0
          %853 = vmatpush.msra.mxu0 0.0
          %854 = vmatpush.msra.mxu0 %v773
          %855 = vmatpush.msra.mxu0 %v772
          %856 = vmatmul.f32.gmra.mxu0 %v829
          %v857 = vpop.f32.mrf.mxu0
          %v858 = vadd.f32 %v816, %v857
          %859 = vmatmul.f32.gmra.mxu0 %v832
          %v860 = vpop.f32.mrf.mxu0
          %v861 = vadd.f32 %v819, %v860
          %862 = vmatmul.f32.gmra.mxu0 %v835
          %v863 = vpop.f32.mrf.mxu0
          %v864 = vadd.f32 %v822, %v863
          %865 = vmatmul.f32.gmra.mxu0 %v838
          %v866 = vpop.f32.mrf.mxu0
          %v867 = vadd.f32 %v825, %v866
          %868 = vdwg.mxu0
          %v869 = vpack.c.bf16 %v858, %v858
          %v870 = vpack.c.bf16 %v861, %v861
          %v871 = vpack.c.bf16 %v864, %v864
          %v872 = vpack.c.bf16 %v867, %v867
          %s873 = smul.addr %s657, 4
          %s874 = scalar_lea.vmem [#allocation2], %s873
          %vm875 = vcmask 125952
          %876 = vst.msk [vmem:[%s874] sm:$0xf] %vm875, %v869
          %877 = vst.msk [vmem:[%s874 + $0x4] sm:$0xf] %vm875, %v870
          %878 = vst.msk [vmem:[%s874 + $0x8] sm:$0xf] %vm875, %v871
          %879 = vst.msk [vmem:[%s874 + $0xc] sm:$0xf] %vm875, %v872
          %v880 = vld [vmem:[#allocation4] sm:$0xf]
          %v881 = vld [vmem:[%s613] sm:$0xf]
          %v883 = vsel %vm691, %v881, 0
          %885 = vmatpush.msra.mxu0 0.0
          %886 = vmatpush.msra.mxu0 0.0
          %887 = vmatpush.msra.mxu0 0.0
          %888 = vmatpush.msra.mxu0 0.0
          %889 = vmatpush.msra.mxu0 0.0
          %890 = vmatpush.msra.mxu0 0.0
          %891 = vmatpush.msra.mxu0 0.0
          %892 = vmatpush.msra.mxu0 0.0
          %893 = vmatpush.msra.mxu0 0.0
          %894 = vmatpush.msra.mxu0 0.0
          %895 = vmatpush.msra.mxu0 0.0
          %896 = vmatpush.msra.mxu0 0.0
          %897 = vmatpush.msra.mxu0 %v766
          %898 = vmatpush.msra.mxu0 %v763
          %899 = vmatpush.msra.mxu0 %v760
          %900 = vmatpush.msra.mxu0 %v757
          %901 = vmatmul.f32.gmra.mxu0 %v883
          %v902 = vpop.f32.mrf.mxu0
          %v903 = vadd.f32 0.0, %v902
          %904 = vdwg.mxu0
          %v905 = vadd.f32 %v880, %v903
          %906 = vst.msk [vmem:[#allocation4] sm:$0xf] %vm875, %v905
        $region76: #{tpu_custom_call.1} parent=67 // pred_fallthru
          _
        %p907 = scmp.eq.s32.totalorder %s32, 1
        // Predicated region
        $region77: #{tpu_custom_call.1} parent=67 // pred_check
          %p908 = pneg %p907
        $region78: #{tpu_custom_call.1} parent=67 // pred_check_branch
          %910 = sbr.rel (%p908) target = $region80
        $region79: #{tpu_custom_call.1} parent=67 // pred_region
          %s911 = sshra.s32 %s644, 3
          %s912 = sand.u32 %s644, 7
          %s913 = smul.addr %s911, 4
          %s914 = scalar_lea.vmem %s590, %s913
          %v915 = vld [vmem:[%s914] sm:$0xf]
          %v916 = vld [vmem:[%s914 + $0x4] sm:$0xf]
          %v917 = vld [vmem:[%s914 + $0x8] sm:$0xf]
          %v918 = vld [vmem:[%s914 + $0xc] sm:$0xf]
          %v919 = vld [vmem:[#allocation2] sm:$0xf]
          %v920 = vld [vmem:[#allocation2 + $0x4] sm:$0xf]
          %v921 = vld [vmem:[#allocation2 + $0x8] sm:$0xf]
          %v922 = vld [vmem:[#allocation2 + $0xc] sm:$0xf]
          %v923 = vld [vmem:[%s632] sm:$0x1]
          %v925 = vperm.slane %v923, 0
          %v931 = vunpack.c.l.b16 %v915
          %v932 = vunpack.c.l.b16 %v916
          %v933 = vunpack.c.l.b16 %v917
          %v934 = vunpack.c.l.b16 %v918
          %v935 = vpack.c.b16 %v932, %v931
          %v936 = vpack.c.b16 %v934, %v933
          %v941 = vunpack.c.l.b16 %v919
          %v942 = vunpack.c.l.b16 %v920
          %v943 = vunpack.c.l.b16 %v921
          %v944 = vunpack.c.l.b16 %v922
          %v945 = vpack.c.b16 %v942, %v941
          %v946 = vpack.c.b16 %v944, %v943
          %vm949 = vcmask 261120
          %v951 = vsel %vm949, %v935, 0
          %v954 = vsel %vm949, %v936, 0
          %956 = vmatpush.bf16.msra.mxu0 0
          %957 = vmatpush.bf16.msra.mxu0 0
          %958 = vmatpush.bf16.msra.mxu0 0
          %959 = vmatpush.bf16.msra.mxu0 0
          %960 = vmatpush.bf16.msra.mxu0 0
          %961 = vmatpush.bf16.msra.mxu0 0
          %962 = vmatpush.bf16.msra.mxu0 %v946
          %963 = vmatpush.bf16.msra.mxu0 %v945
          %964 = vmatmul.bf16.gmra.mxu0 %v951
          %v965 = vpop.f32.mrf.mxu0
          %v966 = vadd.f32 %v925, %v965
          %v967 = vpop.f32.mrf.mxu0
          %v968 = vadd.f32 %v925, %v967
          %969 = vmatmul.bf16.gmra.mxu0 %v954
          %v970 = vpop.f32.mrf.mxu0
          %v971 = vadd.f32 %v925, %v970
          %v972 = vpop.f32.mrf.mxu0
          %v973 = vadd.f32 %v925, %v972
          %974 = vdwg.mxu0
          %v975 = vmax.f32 %v966, 0.0
          %v976 = vmax.f32 %v968, 0.0
          %v977 = vmax.f32 %v971, 0.0
          %v978 = vmax.f32 %v973, 0.0
          %v979 = vld [vmem:[#allocation3] sm:$0xf]
          %v980 = vld [vmem:[%s609] sm:$0xf]
          %v982 = vsel %vm949, %v980, 0
          %984 = vmatpush.msra.mxu0 0.0
          %985 = vmatpush.msra.mxu0 0.0
          %986 = vmatpush.msra.mxu0 0.0
          %987 = vmatpush.msra.mxu0 0.0
          %988 = vmatpush.msra.mxu0 0.0
          %989 = vmatpush.msra.mxu0 0.0
          %990 = vmatpush.msra.mxu0 0.0
          %991 = vmatpush.msra.mxu0 0.0
          %992 = vmatpush.msra.mxu0 0.0
          %993 = vmatpush.msra.mxu0 0.0
          %994 = vmatpush.msra.mxu0 0.0
          %995 = vmatpush.msra.mxu0 0.0
          %996 = vmatpush.msra.mxu0 %v978
          %997 = vmatpush.msra.mxu0 %v977
          %998 = vmatpush.msra.mxu0 %v976
          %999 = vmatpush.msra.mxu0 %v975
          %1000 = vmatmul.f32.gmra.mxu0 %v982
          %v1001 = vpop.f32.mrf.mxu0
          %v1002 = vadd.f32 0.0, %v1001
          %1003 = vdwg.mxu0
          %v1004 = vadd.f32 %v979, %v1002
          %vm1005 = vcmask 125952
          %1006 = vst.msk [vmem:[#allocation3] sm:$0xf] %vm1005, %v1004
        $region80: #{tpu_custom_call.1} parent=67 // pred_fallthru
          _
        %p1007 = pnand %p907, %p646
        %p1008 = pneg %p1007
        // Predicated region
        $region81: #{tpu_custom_call.1} parent=67 // pred_check
          _
        $region82: #{tpu_custom_call.1} parent=67 // pred_check_branch
          %1010 = sbr.rel (%p1007) target = $region84
        $region83: #{tpu_custom_call.1} parent=67 // pred_region
          %v1011 = vld [vmem:[#allocation3] sm:$0xf]
          %v1012 = vld [vmem:[%s637] sm:$0xff]
          %v1013 = vld [vmem:[%s637 + $0x8] sm:$0xff]
          %v1014 = vld [vmem:[#allocation4] sm:$0xf]
          %v1015 = vld [vmem:[%s642] sm:$0xff]
          %v1016 = vld [vmem:[%s642 + $0x8] sm:$0xff]
          %vm1017 = vcmask 130048
          %v1019 = vsel %vm1017, %v1014, 0
          %1021 = vmatpush.msra.mxu0 0.0
          %1022 = vmatpush.msra.mxu0 0.0
          %1023 = vmatpush.msra.mxu0 0.0
          %1024 = vmatpush.msra.mxu0 0.0
          %1025 = vmatpush.msra.mxu0 0.0
          %1026 = vmatpush.msra.mxu0 0.0
          %1027 = vmatpush.msra.mxu0 0.0
          %1028 = vmatpush.msra.mxu0 0.0
          %1029 = vmatpush.msra.mxu0 0.0
          %1030 = vmatpush.msra.mxu0 0.0
          %1031 = vmatpush.msra.mxu0 0.0
          %1032 = vmatpush.msra.mxu0 0.0
          %1033 = vmatpush.msra.mxu0 0.0
          %1034 = vmatpush.msra.mxu0 0.0
          %1035 = vmatpush.msra.mxu0 %v1016
          %1036 = vmatpush.msra.mxu0 %v1015
          %1037 = vmatmul.f32.gmra.mxu0 %v1019
          %v1038 = vpop.f32.mrf.mxu0
          %v1039 = vadd.f32 0.0, %v1038
          %1040 = vdwg.mxu0
          %v1042 = vsel %vm1017, %v1011, 0
          %1044 = vmatpush.msra.mxu0 0.0
          %1045 = vmatpush.msra.mxu0 0.0
          %1046 = vmatpush.msra.mxu0 0.0
          %1047 = vmatpush.msra.mxu0 0.0
          %1048 = vmatpush.msra.mxu0 0.0
          %1049 = vmatpush.msra.mxu0 0.0
          %1050 = vmatpush.msra.mxu0 0.0
          %1051 = vmatpush.msra.mxu0 0.0
          %1052 = vmatpush.msra.mxu0 0.0
          %1053 = vmatpush.msra.mxu0 0.0
          %1054 = vmatpush.msra.mxu0 0.0
          %1055 = vmatpush.msra.mxu0 0.0
          %1056 = vmatpush.msra.mxu0 0.0
          %1057 = vmatpush.msra.mxu0 0.0
          %1058 = vmatpush.msra.mxu0 %v1013
          %1059 = vmatpush.msra.mxu0 %v1012
          %1060 = vmatmul.f32.gmra.mxu0 %v1042
          %v1061 = vpop.f32.mrf.mxu0
          %v1062 = vadd.f32 %v1039, %v1061
          %1063 = vdwg.mxu0
          %vm1064 = vcmask 60416
          %1065 = vst.msk [vmem:[%s585] sm:$0xf] %vm1064, %v1062
        $region84: #{tpu_custom_call.1} parent=67 // pred_fallthru
          _
        %s1066 = sand.u32 %s367, 1
        %s1067 = scalar_lea.sflag [#allocation6], %s1066
        %s1068 = sand.u32 %s367, 1
        %s1069 = smul.addr %s1068, 4
        %s1070 = scalar_lea.vmem [#allocation5], %s1069
        // Predicated region
        $region85: #{tpu_custom_call.1} parent=67 // pred_check
          %p1071 = pneg %p377
        $region86: #{tpu_custom_call.1} parent=67 // pred_check_branch
          %1073 = sbr.rel (%p1071) target = $region88
        $region87: #{tpu_custom_call.1} parent=67 // pred_region
          %1075 = vsyncadd %s1067, 0
          %s1076 = smul.addr %s31, 4
          %s1077 = scalar_lea.hbm %s12, %s1076
          %s1079 = sshll.u32 %s1070, 4
          %s1080 = int_to_ptr.vmem [resolvable:$true] %s1079
          %s1081 = sshll.u32 %s1077, 4
          %s1082 = int_to_ptr.hbm [resolvable:$true] %s1081
          %1084 = dma.vmem_to_hbm [thread:$0]  %s1080, 64, %s1082, %s1067
        $region88: #{tpu_custom_call.1} parent=67 // pred_fallthru
          _
      $region68: #{tpu_custom_call.1} parent=5 // pred_fallthru
        _
      %p1085 = scmp.le.s32.totalorder 2, %s21
      // Predicated region
      $region89: #{tpu_custom_call.1} parent=5 // pred_check
        %p1086 = pneg %p1085
      $region90: #{tpu_custom_call.1} parent=5 // pred_check_branch
        %1088 = sbr.rel (%p1086) target = $region92
      $region91: #{tpu_custom_call.1} parent=5 // pred_region
        %s1089 = ssub.s32 %s21, 2
        // Predicated region
        $region93: #{tpu_custom_call.1} parent=91 // pred_check
          %p1090 = pneg %p383
        $region94: #{tpu_custom_call.1} parent=91 // pred_check_branch
          %1092 = sbr.rel (%p1090) target = $region96
        $region95: #{tpu_custom_call.1} parent=91 // pred_region
          %s1093 = sand.u32 %s368, 1
          %s1094 = scalar_lea.sflag [#allocation6], %s1093
          %s1095 = sand.u32 %s368, 1
          %s1096 = smul.addr %s1095, 4
          %s1097 = scalar_lea.vmem [#allocation5], %s1096
          %1099 = dma.done %s1094, 64
        $region96: #{tpu_custom_call.1} parent=91 // pred_fallthru
          _
      $region92: #{tpu_custom_call.1} parent=5 // pred_fallthru
        _
    $region6: #{tpu_custom_call.1} parent=1 // loop_footer
      %s25 = sadd.s32 1, %s21
    $region7: #{tpu_custom_call.1} parent=1 // loop_footer_branch
      %20 = sbr.rel target = $region3
    $region8: #{tpu_custom_call.1} parent=1 // loop_exit
      _
    %1100 = vsyncpa [#allocation6], 1
    %s1101 = scalar_lea.sflag [#allocation6], 1
    %1102 = vsyncpa %s1101, 1

</llo_original>
